<compile_context>
chip_gen: v7x
topology: tpu7x:2x2x1
jax: 0.10.0
libtpu: 0.0.40
codegen_flags: <defaults>
</compile_context>

<pallas_src>
import functools
import math

import jax
import jax.numpy as jnp
from jax.experimental import pallas as pl
from jax.experimental.pallas import tpu as pltpu


def _inner_product_decoder_kernel(zl_ref, ztr_ref, out_ref):
    # zl_ref : (TM, D)  bf16 rows of z for this output-row tile
    # ztr_ref: (D, TN)  bf16 columns of z.T for this output-col tile
    # out_ref: (TM, TN) tile of sigmoid(z @ z.T), stored in out_ref.dtype
    logits = jnp.dot(
        zl_ref[...],
        ztr_ref[...],
        preferred_element_type=jnp.float32,   # f32 accumulation on the MXU
    )
    # Sigmoid in f32 (v5e EUP/VPU have no bf16 path); cast only at the store.
    out_ref[...] = jax.nn.sigmoid(logits).astype(out_ref.dtype)


def _round_up(x, m):
    return ((x + m - 1) // m) * m


@functools.partial(jax.jit, static_argnames=("tm", "tn", "out_dtype"))
def inner_product_decoder_matmul(z, *, tm=512, tn=512, out_dtype=jnp.float32):
    """Computes sigmoid(z @ z.T) with a tiled Pallas TPU kernel.

    z is cast to bf16 for the MXU (f32 accumulation). Arbitrary N is handled
    by zero-padding up to the tile grid and slicing the result.
    `out_dtype` can be set to jnp.bfloat16 to halve HBM writeback if the
    consumer tolerates it (default f32 matches the torch module).
    """
    n, d = z.shape

    # Clamp / align tiles for small problems; keep them (8,128)-friendly.
    tm = _round_up(max(128, min(tm, _round_up(n, 128))), 128)
    tn = _round_up(max(128, min(tn, _round_up(n, 128))), 128)
    n_pad = _round_up(n, math.lcm(tm, tn))

    zb = z.astype(jnp.bfloat16)
    if n_pad != n:
        zb = jnp.pad(zb, ((0, n_pad - n), (0, 0)))
    # Pre-transpose once in the wrapper (D x N is tiny): kernel RHS is already
    # a lane-dense [K, N] operand, no in-kernel .T every grid step.
    zbt = zb.T

    grid = (n_pad // tm, n_pad // tn)
    out = pl.pallas_call(
        _inner_product_decoder_kernel,
        out_shape=jax.ShapeDtypeStruct((n_pad, n_pad), out_dtype),
        grid_spec=pltpu.PrefetchScalarGridSpec(
            num_scalar_prefetch=0,
            grid=grid,
            in_specs=[
                # LHS rows: depend only on the output-row tile index i
                # (constant across the inner j axis -> fetched once per i).
                pl.BlockSpec((tm, d), lambda i, j: (i, 0)),
                # Transposed RHS columns: depend only on the output-col tile j.
                pl.BlockSpec((d, tn), lambda i, j: (0, j)),
            ],
            out_specs=pl.BlockSpec((tm, tn), lambda i, j: (i, j)),
        ),
        compiler_params=pltpu.CompilerParams(
            dimension_semantics=("parallel", "parallel"),
        ),
    )(zb, zbt)

    if n_pad != n:
        out = out[:n, :n]
    return out


def inner_product_decoder(z, *, dropout=0.0, training=False, rng=None,
                          tm=512, tn=512, out_dtype=jnp.float32):
    """Full forward: dropout -> z @ z.T -> sigmoid (matches the nn.Module)."""
    z = z.astype(jnp.float32)
    if training and dropout > 0.0:
        # Inverted dropout, same as F.dropout; applied once so both matmul
        # operands see an identical mask.
        keep = 1.0 - dropout
        mask = jax.random.bernoulli(rng, keep, z.shape)
        z = jnp.where(mask, z / keep, 0.0)
    # Eval mode: dropout is the identity, exactly like F.dropout(training=False).
    return inner_product_decoder_matmul(z, tm=tm, tn=tn, out_dtype=out_dtype)


if __name__ == "__main__":
    key = jax.random.PRNGKey(0)
    # Small, module-consistent shapes: a 300-node graph with 64-d latents
    # (also exercises the non-multiple-of-128 padding path).
    N, D = 300, 64
    z = jax.random.normal(key, (N, D), dtype=jnp.float32)

    # Eval-mode forward (dropout inactive), default large-tile path.
    b_hat = inner_product_decoder(z, dropout=0.5, training=False)
    b_hat = jax.block_until_ready(b_hat)
    assert b_hat.shape == (N, N)

    # Reference with the same bf16 operand rounding + f32 accumulation.
    zb16 = z.astype(jnp.bfloat16)
    ref_bf16 = jax.nn.sigmoid(
        jnp.dot(zb16, zb16.T, preferred_element_type=jnp.float32))
    assert jnp.allclose(b_hat, ref_bf16, atol=2e-3, rtol=2e-3)

    # Loose sanity check against the exact f32 torch-equivalent reference
    # (tolerance accounts for bf16 operand quantization).
    ref_f32 = jax.nn.sigmoid(z @ z.T)
    assert jnp.max(jnp.abs(b_hat - ref_f32)) < 6e-2

    # Also exercise the multi-tile grid path (pads 300 -> 384, 3x3 grid).
    b_hat_small = jax.block_until_ready(
        inner_product_decoder(z, training=False, tm=128, tn=128))
    assert jnp.allclose(b_hat_small, ref_bf16, atol=2e-3, rtol=2e-3)

    print("KERNEL_OK")
</pallas_src>

<mosaic_0001>
module attributes {stable_mosaic.version = 11 : i64} {
  func.func @_inner_product_decoder_kernel(%arg0: i32, %arg1: i32, %arg2: memref<384x64xbf16, #tpu.memory_space<vmem>>, %arg3: memref<64x384xbf16, #tpu.memory_space<vmem>>, %arg4: memref<384x384xf32, #tpu.memory_space<vmem>>) attributes {dimension_semantics = [#tpu.dimension_semantics<parallel>, #tpu.dimension_semantics<parallel>], iteration_bounds = array<i64: 1, 1>, scalar_prefetch = 0 : i64, scratch_operands = 0 : i64, tpu.core_type = #tpu.core_type<tc>, window_params = [{transform_indices = @transform_0, window_bounds = array<i64: 384, 64>}, {transform_indices = @transform_1, window_bounds = array<i64: 64, 384>}, {transform_indices = @transform_2, window_bounds = array<i64: 384, 384>}]} {
    %c0 = arith.constant 0 : index
    %c0_0 = arith.constant 0 : index
    %0 = vector.load %arg2[%c0, %c0_0] : memref<384x64xbf16, #tpu.memory_space<vmem>>, vector<384x64xbf16>
    %c0_1 = arith.constant 0 : index
    %c0_2 = arith.constant 0 : index
    %1 = vector.load %arg3[%c0_1, %c0_2] : memref<64x384xbf16, #tpu.memory_space<vmem>>, vector<64x384xbf16>
    %cst = arith.constant dense<0.000000e+00> : vector<384x384xf32>
    %2 = tpu.matmul %0, %1, %cst {dimension_numbers = #tpu.dot_dimension_numbers<[1], [0], [0], [1], [0, 0, 1, 1], [], []>} : vector<384x64xbf16>, vector<64x384xbf16>, vector<384x384xf32> -> vector<384x384xf32>
    %3 = arith.negf %2 : vector<384x384xf32>
    %4 = math.exp %3 : vector<384x384xf32>
    %cst_3 = arith.constant 1.000000e+00 : f32
    %5 = vector.broadcast %cst_3 : f32 to vector<384x384xf32>
    %6 = arith.addf %5, %4 : vector<384x384xf32>
    %7 = arith.divf %5, %6 : vector<384x384xf32>
    %c0_4 = arith.constant 0 : index
    %c0_5 = arith.constant 0 : index
    %8 = vector.load %arg4[%c0_4, %c0_5] : memref<384x384xf32, #tpu.memory_space<vmem>>, vector<384x384xf32>
    tpu.vector_store %arg4[%c0_4, %c0_5], %7 {strides = array<i32>} : memref<384x384xf32, #tpu.memory_space<vmem>>, vector<384x384xf32>,
    return
  }
  func.func @transform_0(%arg0: i32, %arg1: i32) -> (i32, i32) {
    %c0_i32 = arith.constant 0 : i32
    %c0_i32_0 = arith.constant 0 : i32
    return %arg0, %c0_i32 : i32, i32
  }
  func.func @transform_1(%arg0: i32, %arg1: i32) -> (i32, i32) {
    %c0_i32 = arith.constant 0 : i32
    %c0_i32_0 = arith.constant 0 : i32
    return %c0_i32, %arg1 : i32, i32
  }
  func.func @transform_2(%arg0: i32, %arg1: i32) -> (i32, i32) {
    %c0_i32 = arith.constant 0 : i32
    return %arg0, %arg1 : i32, i32
  }
}

</mosaic_0001>

<llo_original>
// kernel: inner_product_decoder_matmul.1
$region0: #{inner_product_decoder_matmul.1}
  #allocation0 [shape = 'u32[]', space=smem, size = 0x4, offset = 0x4, fixed_abs, tag = 'smem constant byte address 0x4 - core index']
  #allocation1 [shape = 'u32[144,128]{1,0:T(1,128)}', space=vmem, size = 0x12000, scoped, tag = 'internal scratch']
  %s0 = inlined_call_operand.vmem [shape: bf16[384,64], index: 0, kind: input, shape index: {}]
  %s1 = inlined_call_operand.vmem [shape: bf16[64,384], index: 1, kind: input, shape index: {}]
  %s2 = inlined_call_operand.vmem [shape: f32[384,384], index: 2, kind: output, shape index: {}]
  %s3 = sld [smem:[#allocation0]]
  $region18: #{inner_product_decoder_matmul.1} parent=0
    _
  %s5 = ssub.s32 1, %s3
  %s6 = scalar_select 0, %s5, %s3
  // Predicated region
  $region2: #{inner_product_decoder_matmul.1} parent=0 // pred_check
    _
  $region3: #{inner_product_decoder_matmul.1} parent=0 // pred_check_branch
    %8 = sbr.rel (0) target = $region5
  $region4: #{inner_product_decoder_matmul.1} parent=0 // pred_region
    _
  $region5: #{inner_product_decoder_matmul.1} parent=0 // pred_fallthru
    _
  // Predicated region
  $region6: #{inner_product_decoder_matmul.1} parent=0 // pred_check
    _
  $region7: #{inner_product_decoder_matmul.1} parent=0 // pred_check_branch
    %10 = sbr.rel (0) target = $region9
  $region8: #{inner_product_decoder_matmul.1} parent=0 // pred_region
    _
  $region9: #{inner_product_decoder_matmul.1} parent=0 // pred_fallthru
    _
  %v12 = vld [vmem:[%s0] sm:$0xf]
  %v13 = vld [vmem:[%s0 + $0x4] sm:$0xf]
  %v14 = vld [vmem:[%s0 + $0x8] sm:$0xf]
  %v15 = vld [vmem:[%s0 + $0xc] sm:$0xf]
  %v16 = vld [vmem:[%s0 + $0x10] sm:$0xf]
  %v17 = vld [vmem:[%s0 + $0x14] sm:$0xf]
  %v18 = vld [vmem:[%s0 + $0x18] sm:$0xf]
  %v19 = vld [vmem:[%s0 + $0x1c] sm:$0xf]
  %v20 = vld [vmem:[%s0 + $0x20] sm:$0xf]
  %v21 = vld [vmem:[%s0 + $0x24] sm:$0xf]
  %v22 = vld [vmem:[%s0 + $0x28] sm:$0xf]
  %v23 = vld [vmem:[%s0 + $0x2c] sm:$0xf]
  %v24 = vld [vmem:[%s0 + $0x30] sm:$0xf]
  %v25 = vld [vmem:[%s0 + $0x34] sm:$0xf]
  %v26 = vld [vmem:[%s0 + $0x38] sm:$0xf]
  %v27 = vld [vmem:[%s0 + $0x3c] sm:$0xf]
  %v28 = vld [vmem:[%s0 + $0x40] sm:$0xf]
  %v29 = vld [vmem:[%s0 + $0x44] sm:$0xf]
  %v30 = vld [vmem:[%s0 + $0x48] sm:$0xf]
  %v31 = vld [vmem:[%s0 + $0x4c] sm:$0xf]
  %v32 = vld [vmem:[%s0 + $0x50] sm:$0xf]
  %v33 = vld [vmem:[%s0 + $0x54] sm:$0xf]
  %v34 = vld [vmem:[%s0 + $0x58] sm:$0xf]
  %v35 = vld [vmem:[%s0 + $0x5c] sm:$0xf]
  %v36 = vld [vmem:[%s0 + $0x60] sm:$0xf]
  %v37 = vld [vmem:[%s0 + $0x64] sm:$0xf]
  %v38 = vld [vmem:[%s0 + $0x68] sm:$0xf]
  %v39 = vld [vmem:[%s0 + $0x6c] sm:$0xf]
  %v40 = vld [vmem:[%s0 + $0x70] sm:$0xf]
  %v41 = vld [vmem:[%s0 + $0x74] sm:$0xf]
  %v42 = vld [vmem:[%s0 + $0x78] sm:$0xf]
  %v43 = vld [vmem:[%s0 + $0x7c] sm:$0xf]
  %v44 = vld [vmem:[%s0 + $0x80] sm:$0xf]
  %v45 = vld [vmem:[%s0 + $0x84] sm:$0xf]
  %v46 = vld [vmem:[%s0 + $0x88] sm:$0xf]
  %v47 = vld [vmem:[%s0 + $0x8c] sm:$0xf]
  %v48 = vld [vmem:[%s0 + $0x90] sm:$0xf]
  %v49 = vld [vmem:[%s0 + $0x94] sm:$0xf]
  %v50 = vld [vmem:[%s0 + $0x98] sm:$0xf]
  %v51 = vld [vmem:[%s0 + $0x9c] sm:$0xf]
  %v52 = vld [vmem:[%s0 + $0xa0] sm:$0xf]
  %v53 = vld [vmem:[%s0 + $0xa4] sm:$0xf]
  %v54 = vld [vmem:[%s0 + $0xa8] sm:$0xf]
  %v55 = vld [vmem:[%s0 + $0xac] sm:$0xf]
  %v56 = vld [vmem:[%s0 + $0xb0] sm:$0xf]
  %v57 = vld [vmem:[%s0 + $0xb4] sm:$0xf]
  %v58 = vld [vmem:[%s0 + $0xb8] sm:$0xf]
  %v59 = vld [vmem:[%s0 + $0xbc] sm:$0xf]
  %v60 = vld [vmem:[%s1] sm:$0xff]
  %v61 = vld [vmem:[%s1 + $0x8] sm:$0xf]
  %v62 = vld [vmem:[%s1 + $0xc] sm:$0xff]
  %v63 = vld [vmem:[%s1 + $0x14] sm:$0xf]
  %v64 = vld [vmem:[%s1 + $0x18] sm:$0xff]
  %v65 = vld [vmem:[%s1 + $0x20] sm:$0xf]
  %v66 = vld [vmem:[%s1 + $0x24] sm:$0xff]
  %v67 = vld [vmem:[%s1 + $0x2c] sm:$0xf]
  %v68 = vld [vmem:[%s1 + $0x30] sm:$0xff]
  %v69 = vld [vmem:[%s1 + $0x38] sm:$0xf]
  %v70 = vld [vmem:[%s1 + $0x3c] sm:$0xff]
  %v71 = vld [vmem:[%s1 + $0x44] sm:$0xf]
  %v72 = vld [vmem:[%s1 + $0x48] sm:$0xff]
  %v73 = vld [vmem:[%s1 + $0x50] sm:$0xf]
  %v74 = vld [vmem:[%s1 + $0x54] sm:$0xff]
  %v75 = vld [vmem:[%s1 + $0x5c] sm:$0xf]
  %v124 = vunpack.c.l.b16 %v12
  %v125 = vunpack.c.l.b16 %v13
  %v126 = vunpack.c.l.b16 %v14
  %v127 = vunpack.c.l.b16 %v15
  %v128 = vunpack.c.l.b16 %v16
  %v129 = vunpack.c.l.b16 %v17
  %v130 = vunpack.c.l.b16 %v18
  %v131 = vunpack.c.l.b16 %v19
  %v132 = vunpack.c.l.b16 %v20
  %v133 = vunpack.c.l.b16 %v21
  %v134 = vunpack.c.l.b16 %v22
  %v135 = vunpack.c.l.b16 %v23
  %v136 = vunpack.c.l.b16 %v24
  %v137 = vunpack.c.l.b16 %v25
  %v138 = vunpack.c.l.b16 %v26
  %v139 = vunpack.c.l.b16 %v27
  %v140 = vunpack.c.l.b16 %v28
  %v141 = vunpack.c.l.b16 %v29
  %v142 = vunpack.c.l.b16 %v30
  %v143 = vunpack.c.l.b16 %v31
  %v144 = vunpack.c.l.b16 %v32
  %v145 = vunpack.c.l.b16 %v33
  %v146 = vunpack.c.l.b16 %v34
  %v147 = vunpack.c.l.b16 %v35
  %v148 = vunpack.c.l.b16 %v36
  %v149 = vunpack.c.l.b16 %v37
  %v150 = vunpack.c.l.b16 %v38
  %v151 = vunpack.c.l.b16 %v39
  %v152 = vunpack.c.l.b16 %v40
  %v153 = vunpack.c.l.b16 %v41
  %v154 = vunpack.c.l.b16 %v42
  %v155 = vunpack.c.l.b16 %v43
  %v156 = vunpack.c.l.b16 %v44
  %v157 = vunpack.c.l.b16 %v45
  %v158 = vunpack.c.l.b16 %v46
  %v159 = vunpack.c.l.b16 %v47
  %v160 = vunpack.c.l.b16 %v48
  %v161 = vunpack.c.l.b16 %v49
  %v162 = vunpack.c.l.b16 %v50
  %v163 = vunpack.c.l.b16 %v51
  %v164 = vunpack.c.l.b16 %v52
  %v165 = vunpack.c.l.b16 %v53
  %v166 = vunpack.c.l.b16 %v54
  %v167 = vunpack.c.l.b16 %v55
  %v168 = vunpack.c.l.b16 %v56
  %v169 = vunpack.c.l.b16 %v57
  %v170 = vunpack.c.l.b16 %v58
  %v171 = vunpack.c.l.b16 %v59
  %v172 = vpack.c.b16 %v125, %v124
  %v173 = vpack.c.b16 %v127, %v126
  %v174 = vpack.c.b16 %v129, %v128
  %v175 = vpack.c.b16 %v131, %v130
  %v176 = vpack.c.b16 %v133, %v132
  %v177 = vpack.c.b16 %v135, %v134
  %v178 = vpack.c.b16 %v137, %v136
  %v179 = vpack.c.b16 %v139, %v138
  %v180 = vpack.c.b16 %v141, %v140
  %v181 = vpack.c.b16 %v143, %v142
  %v182 = vpack.c.b16 %v145, %v144
  %v183 = vpack.c.b16 %v147, %v146
  %v184 = vpack.c.b16 %v149, %v148
  %v185 = vpack.c.b16 %v151, %v150
  %v186 = vpack.c.b16 %v153, %v152
  %v187 = vpack.c.b16 %v155, %v154
  %v188 = vpack.c.b16 %v157, %v156
  %v189 = vpack.c.b16 %v159, %v158
  %v190 = vpack.c.b16 %v161, %v160
  %v191 = vpack.c.b16 %v163, %v162
  %v192 = vpack.c.b16 %v165, %v164
  %v193 = vpack.c.b16 %v167, %v166
  %v194 = vpack.c.b16 %v169, %v168
  %v195 = vpack.c.b16 %v171, %v170
  %v212 = vunpack.c.l.b16 %v60
  %v213 = vunpack.c.h.b16 %v60
  %v214 = vunpack.c.l.b16 %v61
  %v215 = vunpack.c.l.b16 %v62
  %v216 = vunpack.c.h.b16 %v62
  %v217 = vunpack.c.l.b16 %v63
  %v218 = vunpack.c.l.b16 %v64
  %v219 = vunpack.c.h.b16 %v64
  %v220 = vunpack.c.l.b16 %v65
  %v221 = vunpack.c.l.b16 %v66
  %v222 = vunpack.c.h.b16 %v66
  %v223 = vunpack.c.l.b16 %v67
  %v224 = vunpack.c.l.b16 %v68
  %v225 = vunpack.c.h.b16 %v68
  %v226 = vunpack.c.l.b16 %v69
  %v227 = vunpack.c.l.b16 %v70
  %v228 = vunpack.c.h.b16 %v70
  %v229 = vunpack.c.l.b16 %v71
  %v230 = vunpack.c.l.b16 %v72
  %v231 = vunpack.c.h.b16 %v72
  %v232 = vunpack.c.l.b16 %v73
  %v233 = vunpack.c.l.b16 %v74
  %v234 = vunpack.c.h.b16 %v74
  %v235 = vunpack.c.l.b16 %v75
  %v236 = vpack.c.b16 %v215, %v212
  %v237 = vpack.c.b16 %v216, %v213
  %v238 = vpack.c.b16 %v217, %v214
  %v239 = vpack.c.b16 %v221, %v218
  %v240 = vpack.c.b16 %v222, %v219
  %v241 = vpack.c.b16 %v223, %v220
  %v242 = vpack.c.b16 %v227, %v224
  %v243 = vpack.c.b16 %v228, %v225
  %v244 = vpack.c.b16 %v229, %v226
  %v245 = vpack.c.b16 %v233, %v230
  %v246 = vpack.c.b16 %v234, %v231
  %v247 = vpack.c.b16 %v235, %v232
  %vm260 = vcmask 523264
  %v262 = vsel %vm260, %v172, 0
  %v265 = vsel %vm260, %v173, 0
  %v268 = vsel %vm260, %v174, 0
  %v271 = vsel %vm260, %v175, 0
  %v274 = vsel %vm260, %v176, 0
  %v277 = vsel %vm260, %v177, 0
  %v280 = vsel %vm260, %v178, 0
  %v283 = vsel %vm260, %v179, 0
  %v286 = vsel %vm260, %v180, 0
  %v289 = vsel %vm260, %v181, 0
  %v292 = vsel %vm260, %v182, 0
  %v295 = vsel %vm260, %v183, 0
  %v298 = vsel %vm260, %v184, 0
  %v301 = vsel %vm260, %v185, 0
  %v304 = vsel %vm260, %v186, 0
  %v307 = vsel %vm260, %v187, 0
  %v310 = vsel %vm260, %v188, 0
  %v313 = vsel %vm260, %v189, 0
  %v316 = vsel %vm260, %v190, 0
  %v319 = vsel %vm260, %v191, 0
  %v322 = vsel %vm260, %v192, 0
  %v325 = vsel %vm260, %v193, 0
  %v328 = vsel %vm260, %v194, 0
  %v331 = vsel %vm260, %v195, 0
  %333 = vmatprep.subr.bf16.mxu0 %v237
  %334 = vmatpush1.bf16.msra.mxu0 %v236
  %335 = vmatprep.subr.bf16.mxu0 %v240
  %336 = vmatpush1.bf16.msra.mxu0 %v239
  %337 = vmatprep.subr.bf16.mxu0 %v243
  %338 = vmatpush1.bf16.msra.mxu0 %v242
  %339 = vmatprep.subr.bf16.mxu0 %v246
  %340 = vmatpush1.bf16.msra.mxu0 %v245
  %341 = vmatprep.subr.bf16.mxu0 0
  %342 = vmatpush1.bf16.msra.mxu0 0
  %343 = vmatprep.subr.bf16.mxu0 0
  %344 = vmatpush1.bf16.msra.mxu0 0
  %345 = vmatprep.subr.bf16.mxu0 0
  %346 = vmatpush1.bf16.msra.mxu0 0
  %347 = vmatprep.subr.bf16.mxu0 0
  %348 = vmatpush1.bf16.msra.mxu0 0
  %349 = vmatprep.subr.bf16.mxu0 0
  %350 = vmatpush1.bf16.msra.mxu0 0
  %351 = vmatprep.subr.bf16.mxu0 0
  %352 = vmatpush1.bf16.msra.mxu0 0
  %353 = vmatprep.subr.bf16.mxu0 0
  %354 = vmatpush1.bf16.msra.mxu0 0
  %355 = vmatprep.subr.bf16.mxu0 0
  %356 = vmatpush1.bf16.msra.mxu0 0
  %357 = vmatprep.subr.bf16.mxu0 0
  %358 = vmatpush1.bf16.msra.mxu0 0
  %359 = vmatprep.subr.bf16.mxu0 0
  %360 = vmatpush1.bf16.msra.mxu0 0
  %361 = vmatprep.subr.bf16.mxu0 0
  %362 = vmatpush1.bf16.msra.mxu0 0
  %363 = vmatprep.subr.bf16.mxu0 0
  %364 = vmatpush1.bf16.msra.mxu0 0
  %365 = vmatprep.mubr.bf16.mxu0 0
  %366 = vmatmul.mubr.bf16.gmra.mrb[0].mxu0 %v262
  %v367 = vpop.f32.mrb[0].mxu0
  %v368 = vadd.f32 0.0, %v367
  %v369 = vpop.f32.mrb[0].mxu0
  %v370 = vadd.f32 0.0, %v369
  %v371 = vpop.f32.mrb[0].mxu0
  %v372 = vadd.f32 0.0, %v371
  %v373 = vpop.f32.mrb[0].mxu0
  %v374 = vadd.f32 0.0, %v373
  %375 = vmatprep.mubr.bf16.mxu0 0
  %376 = vmatmul.mubr.bf16.gmra.mrb[0].mxu0 %v265
  %v377 = vpop.f32.mrb[0].mxu0
  %v378 = vadd.f32 0.0, %v377
  %v379 = vpop.f32.mrb[0].mxu0
  %v380 = vadd.f32 0.0, %v379
  %v381 = vpop.f32.mrb[0].mxu0
  %v382 = vadd.f32 0.0, %v381
  %v383 = vpop.f32.mrb[0].mxu0
  %v384 = vadd.f32 0.0, %v383
  %385 = vmatprep.mubr.bf16.mxu0 0
  %386 = vmatmul.mubr.bf16.gmra.mrb[0].mxu0 %v268
  %v387 = vpop.f32.mrb[0].mxu0
  %v388 = vadd.f32 0.0, %v387
  %v389 = vpop.f32.mrb[0].mxu0
  %v390 = vadd.f32 0.0, %v389
  %v391 = vpop.f32.mrb[0].mxu0
  %v392 = vadd.f32 0.0, %v391
  %v393 = vpop.f32.mrb[0].mxu0
  %v394 = vadd.f32 0.0, %v393
  %395 = vmatprep.mubr.bf16.mxu0 0
  %396 = vmatmul.mubr.bf16.gmra.mrb[0].mxu0 %v271
  %v397 = vpop.f32.mrb[0].mxu0
  %v398 = vadd.f32 0.0, %v397
  %v399 = vpop.f32.mrb[0].mxu0
  %v400 = vadd.f32 0.0, %v399
  %v401 = vpop.f32.mrb[0].mxu0
  %v402 = vadd.f32 0.0, %v401
  %v403 = vpop.f32.mrb[0].mxu0
  %v404 = vadd.f32 0.0, %v403
  %405 = vmatprep.mubr.bf16.mxu0 0
  %406 = vmatmul.mubr.bf16.gmra.mrb[0].mxu0 %v274
  %v407 = vpop.f32.mrb[0].mxu0
  %v408 = vadd.f32 0.0, %v407
  %v409 = vpop.f32.mrb[0].mxu0
  %v410 = vadd.f32 0.0, %v409
  %v411 = vpop.f32.mrb[0].mxu0
  %v412 = vadd.f32 0.0, %v411
  %v413 = vpop.f32.mrb[0].mxu0
  %v414 = vadd.f32 0.0, %v413
  %415 = vmatprep.mubr.bf16.mxu0 0
  %416 = vmatmul.mubr.bf16.gmra.mrb[0].mxu0 %v277
  %v417 = vpop.f32.mrb[0].mxu0
  %v418 = vadd.f32 0.0, %v417
  %v419 = vpop.f32.mrb[0].mxu0
  %v420 = vadd.f32 0.0, %v419
  %v421 = vpop.f32.mrb[0].mxu0
  %v422 = vadd.f32 0.0, %v421
  %v423 = vpop.f32.mrb[0].mxu0
  %v424 = vadd.f32 0.0, %v423
  %425 = vmatprep.mubr.bf16.mxu0 0
  %426 = vmatmul.mubr.bf16.gmra.mrb[0].mxu0 %v280
  %v427 = vpop.f32.mrb[0].mxu0
  %v428 = vadd.f32 0.0, %v427
  %v429 = vpop.f32.mrb[0].mxu0
  %v430 = vadd.f32 0.0, %v429
  %v431 = vpop.f32.mrb[0].mxu0
  %v432 = vadd.f32 0.0, %v431
  %v433 = vpop.f32.mrb[0].mxu0
  %v434 = vadd.f32 0.0, %v433
  %435 = vmatprep.mubr.bf16.mxu0 0
  %436 = vmatmul.mubr.bf16.gmra.mrb[0].mxu0 %v283
  %v437 = vpop.f32.mrb[0].mxu0
  %v438 = vadd.f32 0.0, %v437
  %v439 = vpop.f32.mrb[0].mxu0
  %v440 = vadd.f32 0.0, %v439
  %v441 = vpop.f32.mrb[0].mxu0
  %v442 = vadd.f32 0.0, %v441
  %v443 = vpop.f32.mrb[0].mxu0
  %v444 = vadd.f32 0.0, %v443
  %445 = vmatprep.mubr.bf16.mxu0 0
  %446 = vmatmul.mubr.bf16.gmra.mrb[0].mxu0 %v286
  %v447 = vpop.f32.mrb[0].mxu0
  %v448 = vadd.f32 0.0, %v447
  %v449 = vpop.f32.mrb[0].mxu0
  %v450 = vadd.f32 0.0, %v449
  %v451 = vpop.f32.mrb[0].mxu0
  %v452 = vadd.f32 0.0, %v451
  %v453 = vpop.f32.mrb[0].mxu0
  %v454 = vadd.f32 0.0, %v453
  %455 = vmatprep.mubr.bf16.mxu0 0
  %456 = vmatmul.mubr.bf16.gmra.mrb[0].mxu0 %v289
  %v457 = vpop.f32.mrb[0].mxu0
  %v458 = vadd.f32 0.0, %v457
  %v459 = vpop.f32.mrb[0].mxu0
  %v460 = vadd.f32 0.0, %v459
  %v461 = vpop.f32.mrb[0].mxu0
  %v462 = vadd.f32 0.0, %v461
  %v463 = vpop.f32.mrb[0].mxu0
  %v464 = vadd.f32 0.0, %v463
  %465 = vmatprep.mubr.bf16.mxu0 0
  %466 = vmatmul.mubr.bf16.gmra.mrb[0].mxu0 %v292
  %v467 = vpop.f32.mrb[0].mxu0
  %v468 = vadd.f32 0.0, %v467
  %v469 = vpop.f32.mrb[0].mxu0
  %v470 = vadd.f32 0.0, %v469
  %v471 = vpop.f32.mrb[0].mxu0
  %v472 = vadd.f32 0.0, %v471
  %v473 = vpop.f32.mrb[0].mxu0
  %v474 = vadd.f32 0.0, %v473
  %475 = vmatprep.mubr.bf16.mxu0 0
  %476 = vmatmul.mubr.bf16.gmra.mrb[0].mxu0 %v295
  %v477 = vpop.f32.mrb[0].mxu0
  %v478 = vadd.f32 0.0, %v477
  %v479 = vpop.f32.mrb[0].mxu0
  %v480 = vadd.f32 0.0, %v479
  %v481 = vpop.f32.mrb[0].mxu0
  %v482 = vadd.f32 0.0, %v481
  %v483 = vpop.f32.mrb[0].mxu0
  %v484 = vadd.f32 0.0, %v483
  %485 = vmatprep.mubr.bf16.mxu0 0
  %486 = vmatmul.mubr.bf16.gmra.mrb[0].mxu0 %v298
  %v487 = vpop.f32.mrb[0].mxu0
  %v488 = vadd.f32 0.0, %v487
  %v489 = vpop.f32.mrb[0].mxu0
  %v490 = vadd.f32 0.0, %v489
  %v491 = vpop.f32.mrb[0].mxu0
  %v492 = vadd.f32 0.0, %v491
  %v493 = vpop.f32.mrb[0].mxu0
  %v494 = vadd.f32 0.0, %v493
  %495 = vmatprep.mubr.bf16.mxu0 0
  %496 = vmatmul.mubr.bf16.gmra.mrb[0].mxu0 %v301
  %v497 = vpop.f32.mrb[0].mxu0
  %v498 = vadd.f32 0.0, %v497
  %v499 = vpop.f32.mrb[0].mxu0
  %v500 = vadd.f32 0.0, %v499
  %v501 = vpop.f32.mrb[0].mxu0
  %v502 = vadd.f32 0.0, %v501
  %v503 = vpop.f32.mrb[0].mxu0
  %v504 = vadd.f32 0.0, %v503
  %505 = vmatprep.mubr.bf16.mxu0 0
  %506 = vmatmul.mubr.bf16.gmra.mrb[0].mxu0 %v304
  %v507 = vpop.f32.mrb[0].mxu0
  %v508 = vadd.f32 0.0, %v507
  %v509 = vpop.f32.mrb[0].mxu0
  %v510 = vadd.f32 0.0, %v509
  %v511 = vpop.f32.mrb[0].mxu0
  %v512 = vadd.f32 0.0, %v511
  %v513 = vpop.f32.mrb[0].mxu0
  %v514 = vadd.f32 0.0, %v513
  %515 = vmatprep.mubr.bf16.mxu0 0
  %516 = vmatmul.mubr.bf16.gmra.mrb[0].mxu0 %v307
  %v517 = vpop.f32.mrb[0].mxu0
  %v518 = vadd.f32 0.0, %v517
  %v519 = vpop.f32.mrb[0].mxu0
  %v520 = vadd.f32 0.0, %v519
  %v521 = vpop.f32.mrb[0].mxu0
  %v522 = vadd.f32 0.0, %v521
  %v523 = vpop.f32.mrb[0].mxu0
  %v524 = vadd.f32 0.0, %v523
  %525 = vmatprep.mubr.bf16.mxu0 0
  %526 = vmatmul.mubr.bf16.gmra.mrb[0].mxu0 %v310
  %v527 = vpop.f32.mrb[0].mxu0
  %v528 = vadd.f32 0.0, %v527
  %v529 = vpop.f32.mrb[0].mxu0
  %v530 = vadd.f32 0.0, %v529
  %v531 = vpop.f32.mrb[0].mxu0
  %v532 = vadd.f32 0.0, %v531
  %v533 = vpop.f32.mrb[0].mxu0
  %v534 = vadd.f32 0.0, %v533
  %535 = vmatprep.mubr.bf16.mxu0 0
  %536 = vmatmul.mubr.bf16.gmra.mrb[0].mxu0 %v313
  %v537 = vpop.f32.mrb[0].mxu0
  %v538 = vadd.f32 0.0, %v537
  %v539 = vpop.f32.mrb[0].mxu0
  %v540 = vadd.f32 0.0, %v539
  %v541 = vpop.f32.mrb[0].mxu0
  %v542 = vadd.f32 0.0, %v541
  %v543 = vpop.f32.mrb[0].mxu0
  %v544 = vadd.f32 0.0, %v543
  %545 = vmatprep.mubr.bf16.mxu0 0
  %546 = vmatmul.mubr.bf16.gmra.mrb[0].mxu0 %v316
  %v547 = vpop.f32.mrb[0].mxu0
  %v548 = vadd.f32 0.0, %v547
  %v549 = vpop.f32.mrb[0].mxu0
  %v550 = vadd.f32 0.0, %v549
  %v551 = vpop.f32.mrb[0].mxu0
  %v552 = vadd.f32 0.0, %v551
  %v553 = vpop.f32.mrb[0].mxu0
  %v554 = vadd.f32 0.0, %v553
  %555 = vmatprep.mubr.bf16.mxu0 0
  %556 = vmatmul.mubr.bf16.gmra.mrb[0].mxu0 %v319
  %v557 = vpop.f32.mrb[0].mxu0
  %v558 = vadd.f32 0.0, %v557
  %v559 = vpop.f32.mrb[0].mxu0
  %v560 = vadd.f32 0.0, %v559
  %v561 = vpop.f32.mrb[0].mxu0
  %v562 = vadd.f32 0.0, %v561
  %v563 = vpop.f32.mrb[0].mxu0
  %v564 = vadd.f32 0.0, %v563
  %565 = vmatprep.mubr.bf16.mxu0 0
  %566 = vmatmul.mubr.bf16.gmra.mrb[0].mxu0 %v322
  %v567 = vpop.f32.mrb[0].mxu0
  %v568 = vadd.f32 0.0, %v567
  %v569 = vpop.f32.mrb[0].mxu0
  %v570 = vadd.f32 0.0, %v569
  %v571 = vpop.f32.mrb[0].mxu0
  %v572 = vadd.f32 0.0, %v571
  %v573 = vpop.f32.mrb[0].mxu0
  %v574 = vadd.f32 0.0, %v573
  %575 = vmatprep.mubr.bf16.mxu0 0
  %576 = vmatmul.mubr.bf16.gmra.mrb[0].mxu0 %v325
  %v577 = vpop.f32.mrb[0].mxu0
  %v578 = vadd.f32 0.0, %v577
  %v579 = vpop.f32.mrb[0].mxu0
  %v580 = vadd.f32 0.0, %v579
  %v581 = vpop.f32.mrb[0].mxu0
  %v582 = vadd.f32 0.0, %v581
  %v583 = vpop.f32.mrb[0].mxu0
  %v584 = vadd.f32 0.0, %v583
  %585 = vmatprep.mubr.bf16.mxu0 0
  %586 = vmatmul.mubr.bf16.gmra.mrb[0].mxu0 %v328
  %v587 = vpop.f32.mrb[0].mxu0
  %v588 = vadd.f32 0.0, %v587
  %v589 = vpop.f32.mrb[0].mxu0
  %v590 = vadd.f32 0.0, %v589
  %v591 = vpop.f32.mrb[0].mxu0
  %v592 = vadd.f32 0.0, %v591
  %v593 = vpop.f32.mrb[0].mxu0
  %v594 = vadd.f32 0.0, %v593
  %595 = vmatprep.mubr.bf16.mxu0 0
  %596 = vmatmul.mubr.bf16.gmra.mrb[0].mxu0 %v331
  %v597 = vpop.f32.mrb[0].mxu0
  %v598 = vadd.f32 0.0, %v597
  %v599 = vpop.f32.mrb[0].mxu0
  %v600 = vadd.f32 0.0, %v599
  %v601 = vpop.f32.mrb[0].mxu0
  %v602 = vadd.f32 0.0, %v601
  %v603 = vpop.f32.mrb[0].mxu0
  %v604 = vadd.f32 0.0, %v603
  %605 = vdwg.mxu0
  %606 = vmatprep.subr.bf16.mxu0 0
  %607 = vmatpush1.bf16.msra.mxu0 %v238
  %608 = vmatprep.subr.bf16.mxu0 0
  %609 = vmatpush1.bf16.msra.mxu0 %v241
  %610 = vmatprep.subr.bf16.mxu0 0
  %611 = vmatpush1.bf16.msra.mxu0 %v244
  %612 = vmatprep.subr.bf16.mxu0 0
  %613 = vmatpush1.bf16.msra.mxu0 %v247
  %614 = vmatprep.subr.bf16.mxu0 0
  %615 = vmatpush1.bf16.msra.mxu0 0
  %616 = vmatprep.subr.bf16.mxu0 0
  %617 = vmatpush1.bf16.msra.mxu0 0
  %618 = vmatprep.subr.bf16.mxu0 0
  %619 = vmatpush1.bf16.msra.mxu0 0
  %620 = vmatprep.subr.bf16.mxu0 0
  %621 = vmatpush1.bf16.msra.mxu0 0
  %622 = vmatprep.subr.bf16.mxu0 0
  %623 = vmatpush1.bf16.msra.mxu0 0
  %624 = vmatprep.subr.bf16.mxu0 0
  %625 = vmatpush1.bf16.msra.mxu0 0
  %626 = vmatprep.subr.bf16.mxu0 0
  %627 = vmatpush1.bf16.msra.mxu0 0
  %628 = vmatprep.subr.bf16.mxu0 0
  %629 = vmatpush1.bf16.msra.mxu0 0
  %630 = vmatprep.subr.bf16.mxu0 0
  %631 = vmatpush1.bf16.msra.mxu0 0
  %632 = vmatprep.subr.bf16.mxu0 0
  %633 = vmatpush1.bf16.msra.mxu0 0
  %634 = vmatprep.subr.bf16.mxu0 0
  %635 = vmatpush1.bf16.msra.mxu0 0
  %636 = vmatprep.subr.bf16.mxu0 0
  %637 = vmatpush1.bf16.msra.mxu0 0
  %638 = vmatprep.mubr.bf16.mxu0 0
  %639 = vmatmul.mubr.bf16.gmra.mrb[0].mxu0 %v262
  %v640 = vpop.f32.mrb[0].mxu0
  %v641 = vadd.f32 0.0, %v640
  %v642 = vpop.f32.mrb[0].mxu0
  %v643 = vpop.f32.mrb[0].mxu0
  %v644 = vadd.f32 0.0, %v643
  %v645 = vpop.f32.mrb[0].mxu0
  %646 = vmatprep.mubr.bf16.mxu0 0
  %647 = vmatmul.mubr.bf16.gmra.mrb[0].mxu0 %v265
  %v648 = vpop.f32.mrb[0].mxu0
  %v649 = vadd.f32 0.0, %v648
  %v650 = vpop.f32.mrb[0].mxu0
  %v651 = vpop.f32.mrb[0].mxu0
  %v652 = vadd.f32 0.0, %v651
  %v653 = vpop.f32.mrb[0].mxu0
  %654 = vmatprep.mubr.bf16.mxu0 0
  %655 = vmatmul.mubr.bf16.gmra.mrb[0].mxu0 %v268
  %v656 = vpop.f32.mrb[0].mxu0
  %v657 = vadd.f32 0.0, %v656
  %v658 = vpop.f32.mrb[0].mxu0
  %v659 = vpop.f32.mrb[0].mxu0
  %v660 = vadd.f32 0.0, %v659
  %v661 = vpop.f32.mrb[0].mxu0
  %662 = vmatprep.mubr.bf16.mxu0 0
  %663 = vmatmul.mubr.bf16.gmra.mrb[0].mxu0 %v271
  %v664 = vpop.f32.mrb[0].mxu0
  %v665 = vadd.f32 0.0, %v664
  %v666 = vpop.f32.mrb[0].mxu0
  %v667 = vpop.f32.mrb[0].mxu0
  %v668 = vadd.f32 0.0, %v667
  %v669 = vpop.f32.mrb[0].mxu0
  %670 = vmatprep.mubr.bf16.mxu0 0
  %671 = vmatmul.mubr.bf16.gmra.mrb[0].mxu0 %v274
  %v672 = vpop.f32.mrb[0].mxu0
  %v673 = vadd.f32 0.0, %v672
  %v674 = vpop.f32.mrb[0].mxu0
  %v675 = vpop.f32.mrb[0].mxu0
  %v676 = vadd.f32 0.0, %v675
  %v677 = vpop.f32.mrb[0].mxu0
  %678 = vmatprep.mubr.bf16.mxu0 0
  %679 = vmatmul.mubr.bf16.gmra.mrb[0].mxu0 %v277
  %v680 = vpop.f32.mrb[0].mxu0
  %v681 = vadd.f32 0.0, %v680
  %v682 = vpop.f32.mrb[0].mxu0
  %v683 = vpop.f32.mrb[0].mxu0
  %v684 = vadd.f32 0.0, %v683
  %v685 = vpop.f32.mrb[0].mxu0
  %686 = vmatprep.mubr.bf16.mxu0 0
  %687 = vmatmul.mubr.bf16.gmra.mrb[0].mxu0 %v280
  %v688 = vpop.f32.mrb[0].mxu0
  %v689 = vadd.f32 0.0, %v688
  %v690 = vpop.f32.mrb[0].mxu0
  %v691 = vpop.f32.mrb[0].mxu0
  %v692 = vadd.f32 0.0, %v691
  %v693 = vpop.f32.mrb[0].mxu0
  %694 = vmatprep.mubr.bf16.mxu0 0
  %695 = vmatmul.mubr.bf16.gmra.mrb[0].mxu0 %v283
  %v696 = vpop.f32.mrb[0].mxu0
  %v697 = vadd.f32 0.0, %v696
  %v698 = vpop.f32.mrb[0].mxu0
  %v699 = vpop.f32.mrb[0].mxu0
  %v700 = vadd.f32 0.0, %v699
  %v701 = vpop.f32.mrb[0].mxu0
  %702 = vmatprep.mubr.bf16.mxu0 0
  %703 = vmatmul.mubr.bf16.gmra.mrb[0].mxu0 %v286
  %v704 = vpop.f32.mrb[0].mxu0
  %v705 = vadd.f32 0.0, %v704
  %v706 = vpop.f32.mrb[0].mxu0
  %v707 = vpop.f32.mrb[0].mxu0
  %v708 = vadd.f32 0.0, %v707
  %v709 = vpop.f32.mrb[0].mxu0
  %710 = vmatprep.mubr.bf16.mxu0 0
  %711 = vmatmul.mubr.bf16.gmra.mrb[0].mxu0 %v289
  %v712 = vpop.f32.mrb[0].mxu0
  %v713 = vadd.f32 0.0, %v712
  %v714 = vpop.f32.mrb[0].mxu0
  %v715 = vpop.f32.mrb[0].mxu0
  %v716 = vadd.f32 0.0, %v715
  %v717 = vpop.f32.mrb[0].mxu0
  %718 = vmatprep.mubr.bf16.mxu0 0
  %719 = vmatmul.mubr.bf16.gmra.mrb[0].mxu0 %v292
  %v720 = vpop.f32.mrb[0].mxu0
  %v721 = vadd.f32 0.0, %v720
  %v722 = vpop.f32.mrb[0].mxu0
  %v723 = vpop.f32.mrb[0].mxu0
  %v724 = vadd.f32 0.0, %v723
  %v725 = vpop.f32.mrb[0].mxu0
  %726 = vmatprep.mubr.bf16.mxu0 0
  %727 = vmatmul.mubr.bf16.gmra.mrb[0].mxu0 %v295
  %v728 = vpop.f32.mrb[0].mxu0
  %v729 = vadd.f32 0.0, %v728
  %v730 = vpop.f32.mrb[0].mxu0
  %v731 = vpop.f32.mrb[0].mxu0
  %v732 = vadd.f32 0.0, %v731
  %v733 = vpop.f32.mrb[0].mxu0
  %734 = vmatprep.mubr.bf16.mxu0 0
  %735 = vmatmul.mubr.bf16.gmra.mrb[0].mxu0 %v298
  %v736 = vpop.f32.mrb[0].mxu0
  %v737 = vadd.f32 0.0, %v736
  %v738 = vpop.f32.mrb[0].mxu0
  %v739 = vpop.f32.mrb[0].mxu0
  %v740 = vadd.f32 0.0, %v739
  %v741 = vpop.f32.mrb[0].mxu0
  %742 = vmatprep.mubr.bf16.mxu0 0
  %743 = vmatmul.mubr.bf16.gmra.mrb[0].mxu0 %v301
  %v744 = vpop.f32.mrb[0].mxu0
  %v745 = vadd.f32 0.0, %v744
  %v746 = vpop.f32.mrb[0].mxu0
  %v747 = vpop.f32.mrb[0].mxu0
  %v748 = vadd.f32 0.0, %v747
  %v749 = vpop.f32.mrb[0].mxu0
  %750 = vmatprep.mubr.bf16.mxu0 0
  %751 = vmatmul.mubr.bf16.gmra.mrb[0].mxu0 %v304
  %v752 = vpop.f32.mrb[0].mxu0
  %v753 = vadd.f32 0.0, %v752
  %v754 = vpop.f32.mrb[0].mxu0
  %v755 = vpop.f32.mrb[0].mxu0
  %v756 = vadd.f32 0.0, %v755
  %v757 = vpop.f32.mrb[0].mxu0
  %758 = vmatprep.mubr.bf16.mxu0 0
  %759 = vmatmul.mubr.bf16.gmra.mrb[0].mxu0 %v307
  %v760 = vpop.f32.mrb[0].mxu0
  %v761 = vadd.f32 0.0, %v760
  %v762 = vpop.f32.mrb[0].mxu0
  %v763 = vpop.f32.mrb[0].mxu0
  %v764 = vadd.f32 0.0, %v763
  %v765 = vpop.f32.mrb[0].mxu0
  %766 = vmatprep.mubr.bf16.mxu0 0
  %767 = vmatmul.mubr.bf16.gmra.mrb[0].mxu0 %v310
  %v768 = vpop.f32.mrb[0].mxu0
  %v769 = vadd.f32 0.0, %v768
  %v770 = vpop.f32.mrb[0].mxu0
  %v771 = vpop.f32.mrb[0].mxu0
  %v772 = vadd.f32 0.0, %v771
  %v773 = vpop.f32.mrb[0].mxu0
  %774 = vmatprep.mubr.bf16.mxu0 0
  %775 = vmatmul.mubr.bf16.gmra.mrb[0].mxu0 %v313
  %v776 = vpop.f32.mrb[0].mxu0
  %v777 = vadd.f32 0.0, %v776
  %v778 = vpop.f32.mrb[0].mxu0
  %v779 = vpop.f32.mrb[0].mxu0
  %v780 = vadd.f32 0.0, %v779
  %v781 = vpop.f32.mrb[0].mxu0
  %782 = vmatprep.mubr.bf16.mxu0 0
  %783 = vmatmul.mubr.bf16.gmra.mrb[0].mxu0 %v316
  %v784 = vpop.f32.mrb[0].mxu0
  %v785 = vadd.f32 0.0, %v784
  %v786 = vpop.f32.mrb[0].mxu0
  %v787 = vpop.f32.mrb[0].mxu0
  %v788 = vadd.f32 0.0, %v787
  %v789 = vpop.f32.mrb[0].mxu0
  %790 = vmatprep.mubr.bf16.mxu0 0
  %791 = vmatmul.mubr.bf16.gmra.mrb[0].mxu0 %v319
  %v792 = vpop.f32.mrb[0].mxu0
  %v793 = vadd.f32 0.0, %v792
  %v794 = vpop.f32.mrb[0].mxu0
  %v795 = vpop.f32.mrb[0].mxu0
  %v796 = vadd.f32 0.0, %v795
  %v797 = vpop.f32.mrb[0].mxu0
  %798 = vmatprep.mubr.bf16.mxu0 0
  %799 = vmatmul.mubr.bf16.gmra.mrb[0].mxu0 %v322
  %v800 = vpop.f32.mrb[0].mxu0
  %v801 = vadd.f32 0.0, %v800
  %v802 = vpop.f32.mrb[0].mxu0
  %v803 = vpop.f32.mrb[0].mxu0
  %v804 = vadd.f32 0.0, %v803
  %v805 = vpop.f32.mrb[0].mxu0
  %806 = vmatprep.mubr.bf16.mxu0 0
  %807 = vmatmul.mubr.bf16.gmra.mrb[0].mxu0 %v325
  %v808 = vpop.f32.mrb[0].mxu0
  %v809 = vadd.f32 0.0, %v808
  %v810 = vpop.f32.mrb[0].mxu0
  %v811 = vpop.f32.mrb[0].mxu0
  %v812 = vadd.f32 0.0, %v811
  %v813 = vpop.f32.mrb[0].mxu0
  %814 = vmatprep.mubr.bf16.mxu0 0
  %815 = vmatmul.mubr.bf16.gmra.mrb[0].mxu0 %v328
  %v816 = vpop.f32.mrb[0].mxu0
  %v817 = vadd.f32 0.0, %v816
  %v818 = vpop.f32.mrb[0].mxu0
  %v819 = vpop.f32.mrb[0].mxu0
  %v820 = vadd.f32 0.0, %v819
  %v821 = vpop.f32.mrb[0].mxu0
  %822 = vmatprep.mubr.bf16.mxu0 0
  %823 = vmatmul.mubr.bf16.gmra.mrb[0].mxu0 %v331
  %v824 = vpop.f32.mrb[0].mxu0
  %v825 = vadd.f32 0.0, %v824
  %v826 = vpop.f32.mrb[0].mxu0
  %v827 = vpop.f32.mrb[0].mxu0
  %v828 = vadd.f32 0.0, %v827
  %v829 = vpop.f32.mrb[0].mxu0
  %830 = vdwg.mxu0
  %v831 = vxor.u32 %v368, 2147483648
  %v832 = vxor.u32 %v370, 2147483648
  %v833 = vxor.u32 %v641, 2147483648
  %v834 = vxor.u32 %v372, 2147483648
  %v835 = vxor.u32 %v374, 2147483648
  %v836 = vxor.u32 %v644, 2147483648
  %v837 = vxor.u32 %v378, 2147483648
  %v838 = vxor.u32 %v380, 2147483648
  %v839 = vxor.u32 %v649, 2147483648
  %v840 = vxor.u32 %v382, 2147483648
  %v841 = vxor.u32 %v384, 2147483648
  %v842 = vxor.u32 %v652, 2147483648
  %v843 = vxor.u32 %v388, 2147483648
  %v844 = vxor.u32 %v390, 2147483648
  %v845 = vxor.u32 %v657, 2147483648
  %v846 = vxor.u32 %v392, 2147483648
  %v847 = vxor.u32 %v394, 2147483648
  %v848 = vxor.u32 %v660, 2147483648
  %v849 = vxor.u32 %v398, 2147483648
  %v850 = vxor.u32 %v400, 2147483648
  %v851 = vxor.u32 %v665, 2147483648
  %v852 = vxor.u32 %v402, 2147483648
  %v853 = vxor.u32 %v404, 2147483648
  %v854 = vxor.u32 %v668, 2147483648
  %v855 = vxor.u32 %v408, 2147483648
  %v856 = vxor.u32 %v410, 2147483648
  %v857 = vxor.u32 %v673, 2147483648
  %v858 = vxor.u32 %v412, 2147483648
  %v859 = vxor.u32 %v414, 2147483648
  %v860 = vxor.u32 %v676, 2147483648
  %v861 = vxor.u32 %v418, 2147483648
  %v862 = vxor.u32 %v420, 2147483648
  %v863 = vxor.u32 %v681, 2147483648
  %v864 = vxor.u32 %v422, 2147483648
  %v865 = vxor.u32 %v424, 2147483648
  %v866 = vxor.u32 %v684, 2147483648
  %v867 = vxor.u32 %v428, 2147483648
  %v868 = vxor.u32 %v430, 2147483648
  %v869 = vxor.u32 %v689, 2147483648
  %v870 = vxor.u32 %v432, 2147483648
  %v871 = vxor.u32 %v434, 2147483648
  %v872 = vxor.u32 %v692, 2147483648
  %v873 = vxor.u32 %v438, 2147483648
  %v874 = vxor.u32 %v440, 2147483648
  %v875 = vxor.u32 %v697, 2147483648
  %v876 = vxor.u32 %v442, 2147483648
  %v877 = vxor.u32 %v444, 2147483648
  %v878 = vxor.u32 %v700, 2147483648
  %v879 = vxor.u32 %v448, 2147483648
  %v880 = vxor.u32 %v450, 2147483648
  %v881 = vxor.u32 %v705, 2147483648
  %v882 = vxor.u32 %v452, 2147483648
  %v883 = vxor.u32 %v454, 2147483648
  %v884 = vxor.u32 %v708, 2147483648
  %v885 = vxor.u32 %v458, 2147483648
  %v886 = vxor.u32 %v460, 2147483648
  %v887 = vxor.u32 %v713, 2147483648
  %v888 = vxor.u32 %v462, 2147483648
  %v889 = vxor.u32 %v464, 2147483648
  %v890 = vxor.u32 %v716, 2147483648
  %v891 = vxor.u32 %v468, 2147483648
  %v892 = vxor.u32 %v470, 2147483648
  %v893 = vxor.u32 %v721, 2147483648
  %v894 = vxor.u32 %v472, 2147483648
  %v895 = vxor.u32 %v474, 2147483648
  %v896 = vxor.u32 %v724, 2147483648
  %v897 = vxor.u32 %v478, 2147483648
  %v898 = vxor.u32 %v480, 2147483648
  %v899 = vxor.u32 %v729, 2147483648
  %v900 = vxor.u32 %v482, 2147483648
  %v901 = vxor.u32 %v484, 2147483648
  %v902 = vxor.u32 %v732, 2147483648
  %v903 = vxor.u32 %v488, 2147483648
  %v904 = vxor.u32 %v490, 2147483648
  %v905 = vxor.u32 %v737, 2147483648
  %v906 = vxor.u32 %v492, 2147483648
  %v907 = vxor.u32 %v494, 2147483648
  %v908 = vxor.u32 %v740, 2147483648
  %v909 = vxor.u32 %v498, 2147483648
  %v910 = vxor.u32 %v500, 2147483648
  %v911 = vxor.u32 %v745, 2147483648
  %v912 = vxor.u32 %v502, 2147483648
  %v913 = vxor.u32 %v504, 2147483648
  %v914 = vxor.u32 %v748, 2147483648
  %v915 = vxor.u32 %v508, 2147483648
  %v916 = vxor.u32 %v510, 2147483648
  %v917 = vxor.u32 %v753, 2147483648
  %v918 = vxor.u32 %v512, 2147483648
  %v919 = vxor.u32 %v514, 2147483648
  %v920 = vxor.u32 %v756, 2147483648
  %v921 = vxor.u32 %v518, 2147483648
  %v922 = vxor.u32 %v520, 2147483648
  %v923 = vxor.u32 %v761, 2147483648
  %v924 = vxor.u32 %v522, 2147483648
  %v925 = vxor.u32 %v524, 2147483648
  %v926 = vxor.u32 %v764, 2147483648
  %v927 = vxor.u32 %v528, 2147483648
  %v928 = vxor.u32 %v530, 2147483648
  %v929 = vxor.u32 %v769, 2147483648
  %v930 = vxor.u32 %v532, 2147483648
  %v931 = vxor.u32 %v534, 2147483648
  %v932 = vxor.u32 %v772, 2147483648
  %v933 = vxor.u32 %v538, 2147483648
  %v934 = vxor.u32 %v540, 2147483648
  %v935 = vxor.u32 %v777, 2147483648
  %v936 = vxor.u32 %v542, 2147483648
  %v937 = vxor.u32 %v544, 2147483648
  %v938 = vxor.u32 %v780, 2147483648
  %v939 = vxor.u32 %v548, 2147483648
  %v940 = vxor.u32 %v550, 2147483648
  %v941 = vxor.u32 %v785, 2147483648
  %v942 = vxor.u32 %v552, 2147483648
  %v943 = vxor.u32 %v554, 2147483648
  %v944 = vxor.u32 %v788, 2147483648
  %v945 = vxor.u32 %v558, 2147483648
  %v946 = vxor.u32 %v560, 2147483648
  %v947 = vxor.u32 %v793, 2147483648
  %v948 = vxor.u32 %v562, 2147483648
  %v949 = vxor.u32 %v564, 2147483648
  %v950 = vxor.u32 %v796, 2147483648
  %v951 = vxor.u32 %v568, 2147483648
  %v952 = vxor.u32 %v570, 2147483648
  %v953 = vxor.u32 %v801, 2147483648
  %v954 = vxor.u32 %v572, 2147483648
  %v955 = vxor.u32 %v574, 2147483648
  %v956 = vxor.u32 %v804, 2147483648
  %v957 = vxor.u32 %v578, 2147483648
  %v958 = vxor.u32 %v580, 2147483648
  %v959 = vxor.u32 %v809, 2147483648
  %v960 = vxor.u32 %v582, 2147483648
  %v961 = vxor.u32 %v584, 2147483648
  %v962 = vxor.u32 %v812, 2147483648
  %v963 = vxor.u32 %v588, 2147483648
  %v964 = vxor.u32 %v590, 2147483648
  %v965 = vxor.u32 %v817, 2147483648
  %v966 = vxor.u32 %v592, 2147483648
  %v967 = vxor.u32 %v594, 2147483648
  %v968 = vxor.u32 %v820, 2147483648
  %v969 = vxor.u32 %v598, 2147483648
  %v970 = vxor.u32 %v600, 2147483648
  %v971 = vxor.u32 %v825, 2147483648
  %v972 = vxor.u32 %v602, 2147483648
  %v973 = vxor.u32 %v604, 2147483648
  %v974 = vxor.u32 %v828, 2147483648
  %v975 = vmul.f32 %v831, 1.442695
  %v976 = vpow.pop %v975
  %v977 = vmul.f32 %v832, 1.442695
  %v978 = vpow.pop %v977
  %v979 = vmul.f32 %v833, 1.442695
  %v980 = vpow.pop %v979
  %v981 = vmul.f32 %v834, 1.442695
  %v982 = vpow.pop %v981
  %v983 = vmul.f32 %v835, 1.442695
  %v984 = vpow.pop %v983
  %v985 = vmul.f32 %v836, 1.442695
  %v986 = vpow.pop %v985
  %v987 = vmul.f32 %v837, 1.442695
  %v988 = vpow.pop %v987
  %v989 = vmul.f32 %v838, 1.442695
  %v990 = vpow.pop %v989
  %v991 = vmul.f32 %v839, 1.442695
  %v992 = vpow.pop %v991
  %v993 = vmul.f32 %v840, 1.442695
  %v994 = vpow.pop %v993
  %v995 = vmul.f32 %v841, 1.442695
  %v996 = vpow.pop %v995
  %v997 = vmul.f32 %v842, 1.442695
  %v998 = vpow.pop %v997
  %v999 = vmul.f32 %v843, 1.442695
  %v1000 = vpow.pop %v999
  %v1001 = vmul.f32 %v844, 1.442695
  %v1002 = vpow.pop %v1001
  %v1003 = vmul.f32 %v845, 1.442695
  %v1004 = vpow.pop %v1003
  %v1005 = vmul.f32 %v846, 1.442695
  %v1006 = vpow.pop %v1005
  %v1007 = vmul.f32 %v847, 1.442695
  %v1008 = vpow.pop %v1007
  %v1009 = vmul.f32 %v848, 1.442695
  %v1010 = vpow.pop %v1009
  %v1011 = vmul.f32 %v849, 1.442695
  %v1012 = vpow.pop %v1011
  %v1013 = vmul.f32 %v850, 1.442695
  %v1014 = vpow.pop %v1013
  %v1015 = vmul.f32 %v851, 1.442695
  %v1016 = vpow.pop %v1015
  %v1017 = vmul.f32 %v852, 1.442695
  %v1018 = vpow.pop %v1017
  %v1019 = vmul.f32 %v853, 1.442695
  %v1020 = vpow.pop %v1019
  %v1021 = vmul.f32 %v854, 1.442695
  %v1022 = vpow.pop %v1021
  %v1023 = vmul.f32 %v855, 1.442695
  %v1024 = vpow.pop %v1023
  %v1025 = vmul.f32 %v856, 1.442695
  %v1026 = vpow.pop %v1025
  %v1027 = vmul.f32 %v857, 1.442695
  %v1028 = vpow.pop %v1027
  %v1029 = vmul.f32 %v858, 1.442695
  %v1030 = vpow.pop %v1029
  %v1031 = vmul.f32 %v859, 1.442695
  %v1032 = vpow.pop %v1031
  %v1033 = vmul.f32 %v860, 1.442695
  %v1034 = vpow.pop %v1033
  %v1035 = vmul.f32 %v861, 1.442695
  %v1036 = vpow.pop %v1035
  %v1037 = vmul.f32 %v862, 1.442695
  %v1038 = vpow.pop %v1037
  %v1039 = vmul.f32 %v863, 1.442695
  %v1040 = vpow.pop %v1039
  %v1041 = vmul.f32 %v864, 1.442695
  %v1042 = vpow.pop %v1041
  %v1043 = vmul.f32 %v865, 1.442695
  %v1044 = vpow.pop %v1043
  %v1045 = vmul.f32 %v866, 1.442695
  %v1046 = vpow.pop %v1045
  %v1047 = vmul.f32 %v867, 1.442695
  %v1048 = vpow.pop %v1047
  %v1049 = vmul.f32 %v868, 1.442695
  %v1050 = vpow.pop %v1049
  %v1051 = vmul.f32 %v869, 1.442695
  %v1052 = vpow.pop %v1051
  %v1053 = vmul.f32 %v870, 1.442695
  %v1054 = vpow.pop %v1053
  %v1055 = vmul.f32 %v871, 1.442695
  %v1056 = vpow.pop %v1055
  %v1057 = vmul.f32 %v872, 1.442695
  %v1058 = vpow.pop %v1057
  %v1059 = vmul.f32 %v873, 1.442695
  %v1060 = vpow.pop %v1059
  %v1061 = vmul.f32 %v874, 1.442695
  %v1062 = vpow.pop %v1061
  %v1063 = vmul.f32 %v875, 1.442695
  %v1064 = vpow.pop %v1063
  %v1065 = vmul.f32 %v876, 1.442695
  %v1066 = vpow.pop %v1065
  %v1067 = vmul.f32 %v877, 1.442695
  %v1068 = vpow.pop %v1067
  %v1069 = vmul.f32 %v878, 1.442695
  %v1070 = vpow.pop %v1069
  %v1071 = vmul.f32 %v879, 1.442695
  %v1072 = vpow.pop %v1071
  %v1073 = vmul.f32 %v880, 1.442695
  %v1074 = vpow.pop %v1073
  %v1075 = vmul.f32 %v881, 1.442695
  %v1076 = vpow.pop %v1075
  %v1077 = vmul.f32 %v882, 1.442695
  %v1078 = vpow.pop %v1077
  %v1079 = vmul.f32 %v883, 1.442695
  %v1080 = vpow.pop %v1079
  %v1081 = vmul.f32 %v884, 1.442695
  %v1082 = vpow.pop %v1081
  %v1083 = vmul.f32 %v885, 1.442695
  %v1084 = vpow.pop %v1083
  %v1085 = vmul.f32 %v886, 1.442695
  %v1086 = vpow.pop %v1085
  %v1087 = vmul.f32 %v887, 1.442695
  %v1088 = vpow.pop %v1087
  %v1089 = vmul.f32 %v888, 1.442695
  %v1090 = vpow.pop %v1089
  %v1091 = vmul.f32 %v889, 1.442695
  %v1092 = vpow.pop %v1091
  %v1093 = vmul.f32 %v890, 1.442695
  %v1094 = vpow.pop %v1093
  %v1095 = vmul.f32 %v891, 1.442695
  %v1096 = vpow.pop %v1095
  %v1097 = vmul.f32 %v892, 1.442695
  %v1098 = vpow.pop %v1097
  %v1099 = vmul.f32 %v893, 1.442695
  %v1100 = vpow.pop %v1099
  %v1101 = vmul.f32 %v894, 1.442695
  %v1102 = vpow.pop %v1101
  %v1103 = vmul.f32 %v895, 1.442695
  %v1104 = vpow.pop %v1103
  %v1105 = vmul.f32 %v896, 1.442695
  %v1106 = vpow.pop %v1105
  %v1107 = vmul.f32 %v897, 1.442695
  %v1108 = vpow.pop %v1107
  %v1109 = vmul.f32 %v898, 1.442695
  %v1110 = vpow.pop %v1109
  %v1111 = vmul.f32 %v899, 1.442695
  %v1112 = vpow.pop %v1111
  %v1113 = vmul.f32 %v900, 1.442695
  %v1114 = vpow.pop %v1113
  %v1115 = vmul.f32 %v901, 1.442695
  %v1116 = vpow.pop %v1115
  %v1117 = vmul.f32 %v902, 1.442695
  %v1118 = vpow.pop %v1117
  %v1119 = vmul.f32 %v903, 1.442695
  %v1120 = vpow.pop %v1119
  %v1121 = vmul.f32 %v904, 1.442695
  %v1122 = vpow.pop %v1121
  %v1123 = vmul.f32 %v905, 1.442695
  %v1124 = vpow.pop %v1123
  %v1125 = vmul.f32 %v906, 1.442695
  %v1126 = vpow.pop %v1125
  %v1127 = vmul.f32 %v907, 1.442695
  %v1128 = vpow.pop %v1127
  %v1129 = vmul.f32 %v908, 1.442695
  %v1130 = vpow.pop %v1129
  %v1131 = vmul.f32 %v909, 1.442695
  %v1132 = vpow.pop %v1131
  %v1133 = vmul.f32 %v910, 1.442695
  %v1134 = vpow.pop %v1133
  %v1135 = vmul.f32 %v911, 1.442695
  %v1136 = vpow.pop %v1135
  %v1137 = vmul.f32 %v912, 1.442695
  %v1138 = vpow.pop %v1137
  %v1139 = vmul.f32 %v913, 1.442695
  %v1140 = vpow.pop %v1139
  %v1141 = vmul.f32 %v914, 1.442695
  %v1142 = vpow.pop %v1141
  %v1143 = vmul.f32 %v915, 1.442695
  %v1144 = vpow.pop %v1143
  %v1145 = vmul.f32 %v916, 1.442695
  %v1146 = vpow.pop %v1145
  %v1147 = vmul.f32 %v917, 1.442695
  %v1148 = vpow.pop %v1147
  %v1149 = vmul.f32 %v918, 1.442695
  %v1150 = vpow.pop %v1149
  %v1151 = vmul.f32 %v919, 1.442695
  %v1152 = vpow.pop %v1151
  %v1153 = vmul.f32 %v920, 1.442695
  %v1154 = vpow.pop %v1153
  %v1155 = vmul.f32 %v921, 1.442695
  %v1156 = vpow.pop %v1155
  %v1157 = vmul.f32 %v922, 1.442695
  %v1158 = vpow.pop %v1157
  %v1159 = vmul.f32 %v923, 1.442695
  %v1160 = vpow.pop %v1159
  %v1161 = vmul.f32 %v924, 1.442695
  %v1162 = vpow.pop %v1161
  %v1163 = vmul.f32 %v925, 1.442695
  %v1164 = vpow.pop %v1163
  %v1165 = vmul.f32 %v926, 1.442695
  %v1166 = vpow.pop %v1165
  %v1167 = vmul.f32 %v927, 1.442695
  %v1168 = vpow.pop %v1167
  %v1169 = vmul.f32 %v928, 1.442695
  %v1170 = vpow.pop %v1169
  %v1171 = vmul.f32 %v929, 1.442695
  %v1172 = vpow.pop %v1171
  %v1173 = vmul.f32 %v930, 1.442695
  %v1174 = vpow.pop %v1173
  %v1175 = vmul.f32 %v931, 1.442695
  %v1176 = vpow.pop %v1175
  %v1177 = vmul.f32 %v932, 1.442695
  %v1178 = vpow.pop %v1177
  %v1179 = vmul.f32 %v933, 1.442695
  %v1180 = vpow.pop %v1179
  %v1181 = vmul.f32 %v934, 1.442695
  %v1182 = vpow.pop %v1181
  %v1183 = vmul.f32 %v935, 1.442695
  %v1184 = vpow.pop %v1183
  %v1185 = vmul.f32 %v936, 1.442695
  %v1186 = vpow.pop %v1185
  %v1187 = vmul.f32 %v937, 1.442695
  %v1188 = vpow.pop %v1187
  %v1189 = vmul.f32 %v938, 1.442695
  %v1190 = vpow.pop %v1189
  %v1191 = vmul.f32 %v939, 1.442695
  %v1192 = vpow.pop %v1191
  %v1193 = vmul.f32 %v940, 1.442695
  %v1194 = vpow.pop %v1193
  %v1195 = vmul.f32 %v941, 1.442695
  %v1196 = vpow.pop %v1195
  %v1197 = vmul.f32 %v942, 1.442695
  %v1198 = vpow.pop %v1197
  %v1199 = vmul.f32 %v943, 1.442695
  %v1200 = vpow.pop %v1199
  %v1201 = vmul.f32 %v944, 1.442695
  %v1202 = vpow.pop %v1201
  %v1203 = vmul.f32 %v945, 1.442695
  %v1204 = vpow.pop %v1203
  %v1205 = vmul.f32 %v946, 1.442695
  %v1206 = vpow.pop %v1205
  %v1207 = vmul.f32 %v947, 1.442695
  %v1208 = vpow.pop %v1207
  %v1209 = vmul.f32 %v948, 1.442695
  %v1210 = vpow.pop %v1209
  %v1211 = vmul.f32 %v949, 1.442695
  %v1212 = vpow.pop %v1211
  %v1213 = vmul.f32 %v950, 1.442695
  %v1214 = vpow.pop %v1213
  %v1215 = vmul.f32 %v951, 1.442695
  %v1216 = vpow.pop %v1215
  %v1217 = vmul.f32 %v952, 1.442695
  %v1218 = vpow.pop %v1217
  %v1219 = vmul.f32 %v953, 1.442695
  %v1220 = vpow.pop %v1219
  %v1221 = vmul.f32 %v954, 1.442695
  %v1222 = vpow.pop %v1221
  %v1223 = vmul.f32 %v955, 1.442695
  %v1224 = vpow.pop %v1223
  %v1225 = vmul.f32 %v956, 1.442695
  %v1226 = vpow.pop %v1225
  %v1227 = vmul.f32 %v957, 1.442695
  %v1228 = vpow.pop %v1227
  %v1229 = vmul.f32 %v958, 1.442695
  %v1230 = vpow.pop %v1229
  %v1231 = vmul.f32 %v959, 1.442695
  %v1232 = vpow.pop %v1231
  %v1233 = vmul.f32 %v960, 1.442695
  %v1234 = vpow.pop %v1233
  %v1235 = vmul.f32 %v961, 1.442695
  %v1236 = vpow.pop %v1235
  %v1237 = vmul.f32 %v962, 1.442695
  %v1238 = vpow.pop %v1237
  %v1239 = vmul.f32 %v963, 1.442695
  %v1240 = vpow.pop %v1239
  %v1241 = vmul.f32 %v964, 1.442695
  %v1242 = vpow.pop %v1241
  %v1243 = vmul.f32 %v965, 1.442695
  %v1244 = vpow.pop %v1243
  %v1245 = vmul.f32 %v966, 1.442695
  %v1246 = vpow.pop %v1245
  %v1247 = vmul.f32 %v967, 1.442695
  %v1248 = vpow.pop %v1247
  %v1249 = vmul.f32 %v968, 1.442695
  %v1250 = vpow.pop %v1249
  %v1251 = vmul.f32 %v969, 1.442695
  %v1252 = vpow.pop %v1251
  %v1253 = vmul.f32 %v970, 1.442695
  %v1254 = vpow.pop %v1253
  %v1255 = vmul.f32 %v971, 1.442695
  %v1256 = vpow.pop %v1255
  %v1257 = vmul.f32 %v972, 1.442695
  %v1258 = vpow.pop %v1257
  %v1259 = vmul.f32 %v973, 1.442695
  %v1260 = vpow.pop %v1259
  %v1261 = vmul.f32 %v974, 1.442695
  %v1262 = vpow.pop %v1261
  %v1263 = vadd.f32 %v976, 1.0
  %v1264 = vadd.f32 %v978, 1.0
  %v1265 = vadd.f32 %v980, 1.0
  %v1266 = vadd.f32 %v982, 1.0
  %v1267 = vadd.f32 %v984, 1.0
  %v1268 = vadd.f32 %v986, 1.0
  %v1269 = vadd.f32 %v988, 1.0
  %v1270 = vadd.f32 %v990, 1.0
  %v1271 = vadd.f32 %v992, 1.0
  %v1272 = vadd.f32 %v994, 1.0
  %v1273 = vadd.f32 %v996, 1.0
  %v1274 = vadd.f32 %v998, 1.0
  %v1275 = vadd.f32 %v1000, 1.0
  %v1276 = vadd.f32 %v1002, 1.0
  %v1277 = vadd.f32 %v1004, 1.0
  %v1278 = vadd.f32 %v1006, 1.0
  %v1279 = vadd.f32 %v1008, 1.0
  %v1280 = vadd.f32 %v1010, 1.0
  %v1281 = vadd.f32 %v1012, 1.0
  %v1282 = vadd.f32 %v1014, 1.0
  %v1283 = vadd.f32 %v1016, 1.0
  %v1284 = vadd.f32 %v1018, 1.0
  %v1285 = vadd.f32 %v1020, 1.0
  %v1286 = vadd.f32 %v1022, 1.0
  %v1287 = vadd.f32 %v1024, 1.0
  %v1288 = vadd.f32 %v1026, 1.0
  %v1289 = vadd.f32 %v1028, 1.0
  %v1290 = vadd.f32 %v1030, 1.0
  %v1291 = vadd.f32 %v1032, 1.0
  %v1292 = vadd.f32 %v1034, 1.0
  %v1293 = vadd.f32 %v1036, 1.0
  %v1294 = vadd.f32 %v1038, 1.0
  %v1295 = vadd.f32 %v1040, 1.0
  %v1296 = vadd.f32 %v1042, 1.0
  %v1297 = vadd.f32 %v1044, 1.0
  %v1298 = vadd.f32 %v1046, 1.0
  %v1299 = vadd.f32 %v1048, 1.0
  %v1300 = vadd.f32 %v1050, 1.0
  %v1301 = vadd.f32 %v1052, 1.0
  %v1302 = vadd.f32 %v1054, 1.0
  %v1303 = vadd.f32 %v1056, 1.0
  %v1304 = vadd.f32 %v1058, 1.0
  %v1305 = vadd.f32 %v1060, 1.0
  %v1306 = vadd.f32 %v1062, 1.0
  %v1307 = vadd.f32 %v1064, 1.0
  %v1308 = vadd.f32 %v1066, 1.0
  %v1309 = vadd.f32 %v1068, 1.0
  %v1310 = vadd.f32 %v1070, 1.0
  %v1311 = vadd.f32 %v1072, 1.0
  %v1312 = vadd.f32 %v1074, 1.0
  %v1313 = vadd.f32 %v1076, 1.0
  %v1314 = vadd.f32 %v1078, 1.0
  %v1315 = vadd.f32 %v1080, 1.0
  %v1316 = vadd.f32 %v1082, 1.0
  %v1317 = vadd.f32 %v1084, 1.0
  %v1318 = vadd.f32 %v1086, 1.0
  %v1319 = vadd.f32 %v1088, 1.0
  %v1320 = vadd.f32 %v1090, 1.0
  %v1321 = vadd.f32 %v1092, 1.0
  %v1322 = vadd.f32 %v1094, 1.0
  %v1323 = vadd.f32 %v1096, 1.0
  %v1324 = vadd.f32 %v1098, 1.0
  %v1325 = vadd.f32 %v1100, 1.0
  %v1326 = vadd.f32 %v1102, 1.0
  %v1327 = vadd.f32 %v1104, 1.0
  %v1328 = vadd.f32 %v1106, 1.0
  %v1329 = vadd.f32 %v1108, 1.0
  %v1330 = vadd.f32 %v1110, 1.0
  %v1331 = vadd.f32 %v1112, 1.0
  %v1332 = vadd.f32 %v1114, 1.0
  %v1333 = vadd.f32 %v1116, 1.0
  %v1334 = vadd.f32 %v1118, 1.0
  %v1335 = vadd.f32 %v1120, 1.0
  %v1336 = vadd.f32 %v1122, 1.0
  %v1337 = vadd.f32 %v1124, 1.0
  %v1338 = vadd.f32 %v1126, 1.0
  %v1339 = vadd.f32 %v1128, 1.0
  %v1340 = vadd.f32 %v1130, 1.0
  %v1341 = vadd.f32 %v1132, 1.0
  %v1342 = vadd.f32 %v1134, 1.0
  %v1343 = vadd.f32 %v1136, 1.0
  %v1344 = vadd.f32 %v1138, 1.0
  %v1345 = vadd.f32 %v1140, 1.0
  %v1346 = vadd.f32 %v1142, 1.0
  %v1347 = vadd.f32 %v1144, 1.0
  %v1348 = vadd.f32 %v1146, 1.0
  %v1349 = vadd.f32 %v1148, 1.0
  %v1350 = vadd.f32 %v1150, 1.0
  %v1351 = vadd.f32 %v1152, 1.0
  %v1352 = vadd.f32 %v1154, 1.0
  %v1353 = vadd.f32 %v1156, 1.0
  %v1354 = vadd.f32 %v1158, 1.0
  %v1355 = vadd.f32 %v1160, 1.0
  %v1356 = vadd.f32 %v1162, 1.0
  %v1357 = vadd.f32 %v1164, 1.0
  %v1358 = vadd.f32 %v1166, 1.0
  %v1359 = vadd.f32 %v1168, 1.0
  %v1360 = vadd.f32 %v1170, 1.0
  %v1361 = vadd.f32 %v1172, 1.0
  %v1362 = vadd.f32 %v1174, 1.0
  %v1363 = vadd.f32 %v1176, 1.0
  %v1364 = vadd.f32 %v1178, 1.0
  %v1365 = vadd.f32 %v1180, 1.0
  %v1366 = vadd.f32 %v1182, 1.0
  %v1367 = vadd.f32 %v1184, 1.0
  %v1368 = vadd.f32 %v1186, 1.0
  %v1369 = vadd.f32 %v1188, 1.0
  %v1370 = vadd.f32 %v1190, 1.0
  %v1371 = vadd.f32 %v1192, 1.0
  %v1372 = vadd.f32 %v1194, 1.0
  %v1373 = vadd.f32 %v1196, 1.0
  %v1374 = vadd.f32 %v1198, 1.0
  %v1375 = vadd.f32 %v1200, 1.0
  %v1376 = vadd.f32 %v1202, 1.0
  %v1377 = vadd.f32 %v1204, 1.0
  %v1378 = vadd.f32 %v1206, 1.0
  %v1379 = vadd.f32 %v1208, 1.0
  %v1380 = vadd.f32 %v1210, 1.0
  %v1381 = vadd.f32 %v1212, 1.0
  %v1382 = vadd.f32 %v1214, 1.0
  %v1383 = vadd.f32 %v1216, 1.0
  %v1384 = vadd.f32 %v1218, 1.0
  %v1385 = vadd.f32 %v1220, 1.0
  %v1386 = vadd.f32 %v1222, 1.0
  %v1387 = vadd.f32 %v1224, 1.0
  %v1388 = vadd.f32 %v1226, 1.0
  %v1389 = vadd.f32 %v1228, 1.0
  %v1390 = vadd.f32 %v1230, 1.0
  %v1391 = vadd.f32 %v1232, 1.0
  %v1392 = vadd.f32 %v1234, 1.0
  %v1393 = vadd.f32 %v1236, 1.0
  %v1394 = vadd.f32 %v1238, 1.0
  %v1395 = vadd.f32 %v1240, 1.0
  %v1396 = vadd.f32 %v1242, 1.0
  %v1397 = vadd.f32 %v1244, 1.0
  %v1398 = vadd.f32 %v1246, 1.0
  %v1399 = vadd.f32 %v1248, 1.0
  %v1400 = vadd.f32 %v1250, 1.0
  %v1401 = vadd.f32 %v1252, 1.0
  %v1402 = vadd.f32 %v1254, 1.0
  %v1403 = vadd.f32 %v1256, 1.0
  %v1404 = vadd.f32 %v1258, 1.0
  %v1405 = vadd.f32 %v1260, 1.0
  %v1406 = vadd.f32 %v1262, 1.0
  %v1407 = vrcp.pop %v1263
  %v1408 = vmul.f32 1.0, %v1407
  %v1409 = vrcp.pop %v1264
  %v1410 = vmul.f32 1.0, %v1409
  %v1411 = vrcp.pop %v1265
  %v1412 = vmul.f32 1.0, %v1411
  %v1413 = vrcp.pop %v1266
  %v1414 = vmul.f32 1.0, %v1413
  %v1415 = vrcp.pop %v1267
  %v1416 = vmul.f32 1.0, %v1415
  %v1417 = vrcp.pop %v1268
  %v1418 = vmul.f32 1.0, %v1417
  %v1419 = vrcp.pop %v1269
  %v1420 = vmul.f32 1.0, %v1419
  %v1421 = vrcp.pop %v1270
  %v1422 = vmul.f32 1.0, %v1421
  %v1423 = vrcp.pop %v1271
  %v1424 = vmul.f32 1.0, %v1423
  %v1425 = vrcp.pop %v1272
  %v1426 = vmul.f32 1.0, %v1425
  %v1427 = vrcp.pop %v1273
  %v1428 = vmul.f32 1.0, %v1427
  %v1429 = vrcp.pop %v1274
  %v1430 = vmul.f32 1.0, %v1429
  %v1431 = vrcp.pop %v1275
  %v1432 = vmul.f32 1.0, %v1431
  %v1433 = vrcp.pop %v1276
  %v1434 = vmul.f32 1.0, %v1433
  %v1435 = vrcp.pop %v1277
  %v1436 = vmul.f32 1.0, %v1435
  %v1437 = vrcp.pop %v1278
  %v1438 = vmul.f32 1.0, %v1437
  %v1439 = vrcp.pop %v1279
  %v1440 = vmul.f32 1.0, %v1439
  %v1441 = vrcp.pop %v1280
  %v1442 = vmul.f32 1.0, %v1441
  %v1443 = vrcp.pop %v1281
  %v1444 = vmul.f32 1.0, %v1443
  %v1445 = vrcp.pop %v1282
  %v1446 = vmul.f32 1.0, %v1445
  %v1447 = vrcp.pop %v1283
  %v1448 = vmul.f32 1.0, %v1447
  %v1449 = vrcp.pop %v1284
  %v1450 = vmul.f32 1.0, %v1449
  %v1451 = vrcp.pop %v1285
  %v1452 = vmul.f32 1.0, %v1451
  %v1453 = vrcp.pop %v1286
  %v1454 = vmul.f32 1.0, %v1453
  %v1455 = vrcp.pop %v1287
  %v1456 = vmul.f32 1.0, %v1455
  %v1457 = vrcp.pop %v1288
  %v1458 = vmul.f32 1.0, %v1457
  %v1459 = vrcp.pop %v1289
  %v1460 = vmul.f32 1.0, %v1459
  %v1461 = vrcp.pop %v1290
  %v1462 = vmul.f32 1.0, %v1461
  %v1463 = vrcp.pop %v1291
  %v1464 = vmul.f32 1.0, %v1463
  %v1465 = vrcp.pop %v1292
  %v1466 = vmul.f32 1.0, %v1465
  %v1467 = vrcp.pop %v1293
  %v1468 = vmul.f32 1.0, %v1467
  %v1469 = vrcp.pop %v1294
  %v1470 = vmul.f32 1.0, %v1469
  %v1471 = vrcp.pop %v1295
  %v1472 = vmul.f32 1.0, %v1471
  %v1473 = vrcp.pop %v1296
  %v1474 = vmul.f32 1.0, %v1473
  %v1475 = vrcp.pop %v1297
  %v1476 = vmul.f32 1.0, %v1475
  %v1477 = vrcp.pop %v1298
  %v1478 = vmul.f32 1.0, %v1477
  %v1479 = vrcp.pop %v1299
  %v1480 = vmul.f32 1.0, %v1479
  %v1481 = vrcp.pop %v1300
  %v1482 = vmul.f32 1.0, %v1481
  %v1483 = vrcp.pop %v1301
  %v1484 = vmul.f32 1.0, %v1483
  %v1485 = vrcp.pop %v1302
  %v1486 = vmul.f32 1.0, %v1485
  %v1487 = vrcp.pop %v1303
  %v1488 = vmul.f32 1.0, %v1487
  %v1489 = vrcp.pop %v1304
  %v1490 = vmul.f32 1.0, %v1489
  %v1491 = vrcp.pop %v1305
  %v1492 = vmul.f32 1.0, %v1491
  %v1493 = vrcp.pop %v1306
  %v1494 = vmul.f32 1.0, %v1493
  %v1495 = vrcp.pop %v1307
  %v1496 = vmul.f32 1.0, %v1495
  %v1497 = vrcp.pop %v1308
  %v1498 = vmul.f32 1.0, %v1497
  %v1499 = vrcp.pop %v1309
  %v1500 = vmul.f32 1.0, %v1499
  %v1501 = vrcp.pop %v1310
  %v1502 = vmul.f32 1.0, %v1501
  %v1503 = vrcp.pop %v1311
  %v1504 = vmul.f32 1.0, %v1503
  %v1505 = vrcp.pop %v1312
  %v1506 = vmul.f32 1.0, %v1505
  %v1507 = vrcp.pop %v1313
  %v1508 = vmul.f32 1.0, %v1507
  %v1509 = vrcp.pop %v1314
  %v1510 = vmul.f32 1.0, %v1509
  %v1511 = vrcp.pop %v1315
  %v1512 = vmul.f32 1.0, %v1511
  %v1513 = vrcp.pop %v1316
  %v1514 = vmul.f32 1.0, %v1513
  %v1515 = vrcp.pop %v1317
  %v1516 = vmul.f32 1.0, %v1515
  %v1517 = vrcp.pop %v1318
  %v1518 = vmul.f32 1.0, %v1517
  %v1519 = vrcp.pop %v1319
  %v1520 = vmul.f32 1.0, %v1519
  %v1521 = vrcp.pop %v1320
  %v1522 = vmul.f32 1.0, %v1521
  %v1523 = vrcp.pop %v1321
  %v1524 = vmul.f32 1.0, %v1523
  %v1525 = vrcp.pop %v1322
  %v1526 = vmul.f32 1.0, %v1525
  %v1527 = vrcp.pop %v1323
  %v1528 = vmul.f32 1.0, %v1527
  %v1529 = vrcp.pop %v1324
  %v1530 = vmul.f32 1.0, %v1529
  %v1531 = vrcp.pop %v1325
  %v1532 = vmul.f32 1.0, %v1531
  %v1533 = vrcp.pop %v1326
  %v1534 = vmul.f32 1.0, %v1533
  %v1535 = vrcp.pop %v1327
  %v1536 = vmul.f32 1.0, %v1535
  %v1537 = vrcp.pop %v1328
  %v1538 = vmul.f32 1.0, %v1537
  %v1539 = vrcp.pop %v1329
  %v1540 = vmul.f32 1.0, %v1539
  %v1541 = vrcp.pop %v1330
  %v1542 = vmul.f32 1.0, %v1541
  %v1543 = vrcp.pop %v1331
  %v1544 = vmul.f32 1.0, %v1543
  %v1545 = vrcp.pop %v1332
  %v1546 = vmul.f32 1.0, %v1545
  %v1547 = vrcp.pop %v1333
  %v1548 = vmul.f32 1.0, %v1547
  %v1549 = vrcp.pop %v1334
  %v1550 = vmul.f32 1.0, %v1549
  %v1551 = vrcp.pop %v1335
  %v1552 = vmul.f32 1.0, %v1551
  %v1553 = vrcp.pop %v1336
  %v1554 = vmul.f32 1.0, %v1553
  %v1555 = vrcp.pop %v1337
  %v1556 = vmul.f32 1.0, %v1555
  %v1557 = vrcp.pop %v1338
  %v1558 = vmul.f32 1.0, %v1557
  %v1559 = vrcp.pop %v1339
  %v1560 = vmul.f32 1.0, %v1559
  %v1561 = vrcp.pop %v1340
  %v1562 = vmul.f32 1.0, %v1561
  %v1563 = vrcp.pop %v1341
  %v1564 = vmul.f32 1.0, %v1563
  %v1565 = vrcp.pop %v1342
  %v1566 = vmul.f32 1.0, %v1565
  %v1567 = vrcp.pop %v1343
  %v1568 = vmul.f32 1.0, %v1567
  %v1569 = vrcp.pop %v1344
  %v1570 = vmul.f32 1.0, %v1569
  %v1571 = vrcp.pop %v1345
  %v1572 = vmul.f32 1.0, %v1571
  %v1573 = vrcp.pop %v1346
  %v1574 = vmul.f32 1.0, %v1573
  %v1575 = vrcp.pop %v1347
  %v1576 = vmul.f32 1.0, %v1575
  %v1577 = vrcp.pop %v1348
  %v1578 = vmul.f32 1.0, %v1577
  %v1579 = vrcp.pop %v1349
  %v1580 = vmul.f32 1.0, %v1579
  %v1581 = vrcp.pop %v1350
  %v1582 = vmul.f32 1.0, %v1581
  %v1583 = vrcp.pop %v1351
  %v1584 = vmul.f32 1.0, %v1583
  %v1585 = vrcp.pop %v1352
  %v1586 = vmul.f32 1.0, %v1585
  %v1587 = vrcp.pop %v1353
  %v1588 = vmul.f32 1.0, %v1587
  %v1589 = vrcp.pop %v1354
  %v1590 = vmul.f32 1.0, %v1589
  %v1591 = vrcp.pop %v1355
  %v1592 = vmul.f32 1.0, %v1591
  %v1593 = vrcp.pop %v1356
  %v1594 = vmul.f32 1.0, %v1593
  %v1595 = vrcp.pop %v1357
  %v1596 = vmul.f32 1.0, %v1595
  %v1597 = vrcp.pop %v1358
  %v1598 = vmul.f32 1.0, %v1597
  %v1599 = vrcp.pop %v1359
  %v1600 = vmul.f32 1.0, %v1599
  %v1601 = vrcp.pop %v1360
  %v1602 = vmul.f32 1.0, %v1601
  %v1603 = vrcp.pop %v1361
  %v1604 = vmul.f32 1.0, %v1603
  %v1605 = vrcp.pop %v1362
  %v1606 = vmul.f32 1.0, %v1605
  %v1607 = vrcp.pop %v1363
  %v1608 = vmul.f32 1.0, %v1607
  %v1609 = vrcp.pop %v1364
  %v1610 = vmul.f32 1.0, %v1609
  %v1611 = vrcp.pop %v1365
  %v1612 = vmul.f32 1.0, %v1611
  %v1613 = vrcp.pop %v1366
  %v1614 = vmul.f32 1.0, %v1613
  %v1615 = vrcp.pop %v1367
  %v1616 = vmul.f32 1.0, %v1615
  %v1617 = vrcp.pop %v1368
  %v1618 = vmul.f32 1.0, %v1617
  %v1619 = vrcp.pop %v1369
  %v1620 = vmul.f32 1.0, %v1619
  %v1621 = vrcp.pop %v1370
  %v1622 = vmul.f32 1.0, %v1621
  %v1623 = vrcp.pop %v1371
  %v1624 = vmul.f32 1.0, %v1623
  %v1625 = vrcp.pop %v1372
  %v1626 = vmul.f32 1.0, %v1625
  %v1627 = vrcp.pop %v1373
  %v1628 = vmul.f32 1.0, %v1627
  %v1629 = vrcp.pop %v1374
  %v1630 = vmul.f32 1.0, %v1629
  %v1631 = vrcp.pop %v1375
  %v1632 = vmul.f32 1.0, %v1631
  %v1633 = vrcp.pop %v1376
  %v1634 = vmul.f32 1.0, %v1633
  %v1635 = vrcp.pop %v1377
  %v1636 = vmul.f32 1.0, %v1635
  %v1637 = vrcp.pop %v1378
  %v1638 = vmul.f32 1.0, %v1637
  %v1639 = vrcp.pop %v1379
  %v1640 = vmul.f32 1.0, %v1639
  %v1641 = vrcp.pop %v1380
  %v1642 = vmul.f32 1.0, %v1641
  %v1643 = vrcp.pop %v1381
  %v1644 = vmul.f32 1.0, %v1643
  %v1645 = vrcp.pop %v1382
  %v1646 = vmul.f32 1.0, %v1645
  %v1647 = vrcp.pop %v1383
  %v1648 = vmul.f32 1.0, %v1647
  %v1649 = vrcp.pop %v1384
  %v1650 = vmul.f32 1.0, %v1649
  %v1651 = vrcp.pop %v1385
  %v1652 = vmul.f32 1.0, %v1651
  %v1653 = vrcp.pop %v1386
  %v1654 = vmul.f32 1.0, %v1653
  %v1655 = vrcp.pop %v1387
  %v1656 = vmul.f32 1.0, %v1655
  %v1657 = vrcp.pop %v1388
  %v1658 = vmul.f32 1.0, %v1657
  %v1659 = vrcp.pop %v1389
  %v1660 = vmul.f32 1.0, %v1659
  %v1661 = vrcp.pop %v1390
  %v1662 = vmul.f32 1.0, %v1661
  %v1663 = vrcp.pop %v1391
  %v1664 = vmul.f32 1.0, %v1663
  %v1665 = vrcp.pop %v1392
  %v1666 = vmul.f32 1.0, %v1665
  %v1667 = vrcp.pop %v1393
  %v1668 = vmul.f32 1.0, %v1667
  %v1669 = vrcp.pop %v1394
  %v1670 = vmul.f32 1.0, %v1669
  %v1671 = vrcp.pop %v1395
  %v1672 = vmul.f32 1.0, %v1671
  %v1673 = vrcp.pop %v1396
  %v1674 = vmul.f32 1.0, %v1673
  %v1675 = vrcp.pop %v1397
  %v1676 = vmul.f32 1.0, %v1675
  %v1677 = vrcp.pop %v1398
  %v1678 = vmul.f32 1.0, %v1677
  %v1679 = vrcp.pop %v1399
  %v1680 = vmul.f32 1.0, %v1679
  %v1681 = vrcp.pop %v1400
  %v1682 = vmul.f32 1.0, %v1681
  %v1683 = vrcp.pop %v1401
  %v1684 = vmul.f32 1.0, %v1683
  %v1685 = vrcp.pop %v1402
  %v1686 = vmul.f32 1.0, %v1685
  %v1687 = vrcp.pop %v1403
  %v1688 = vmul.f32 1.0, %v1687
  %v1689 = vrcp.pop %v1404
  %v1690 = vmul.f32 1.0, %v1689
  %v1691 = vrcp.pop %v1405
  %v1692 = vmul.f32 1.0, %v1691
  %v1693 = vrcp.pop %v1406
  %v1694 = vmul.f32 1.0, %v1693
  %1695 = vst [vmem:[%s2] sm:$0xff] %v1408
  %1696 = vst [vmem:[%s2 + $0x8] sm:$0xff] %v1410
  %1697 = vst [vmem:[%s2 + $0x10] sm:$0xff] %v1412
  %1698 = vst [vmem:[%s2 + $0x18] sm:$0xff] %v1414
  %1699 = vst [vmem:[%s2 + $0x20] sm:$0xff] %v1416
  %1700 = vst [vmem:[%s2 + $0x28] sm:$0xff] %v1418
  %1701 = vst [vmem:[%s2 + $0x30] sm:$0xff] %v1420
  %1702 = vst [vmem:[%s2 + $0x38] sm:$0xff] %v1422
  %1703 = vst [vmem:[%s2 + $0x40] sm:$0xff] %v1424
  %1704 = vst [vmem:[%s2 + $0x48] sm:$0xff] %v1426
  %1705 = vst [vmem:[%s2 + $0x50] sm:$0xff] %v1428
  %1706 = vst [vmem:[%s2 + $0x58] sm:$0xff] %v1430
  %1707 = vst [vmem:[%s2 + $0x60] sm:$0xff] %v1432
  %1708 = vst [vmem:[%s2 + $0x68] sm:$0xff] %v1434
  %1709 = vst [vmem:[%s2 + $0x70] sm:$0xff] %v1436
  %1710 = vst [vmem:[%s2 + $0x78] sm:$0xff] %v1438
  %1711 = vst [vmem:[%s2 + $0x80] sm:$0xff] %v1440
  %1712 = vst [vmem:[%s2 + $0x88] sm:$0xff] %v1442
  %1713 = vst [vmem:[%s2 + $0x90] sm:$0xff] %v1444
  %1714 = vst [vmem:[%s2 + $0x98] sm:$0xff] %v1446
  %1715 = vst [vmem:[%s2 + $0xa0] sm:$0xff] %v1448
  %1716 = vst [vmem:[%s2 + $0xa8] sm:$0xff] %v1450
  %1717 = vst [vmem:[%s2 + $0xb0] sm:$0xff] %v1452
  %1718 = vst [vmem:[%s2 + $0xb8] sm:$0xff] %v1454
  %1719 = vst [vmem:[%s2 + $0xc0] sm:$0xff] %v1456
  %1720 = vst [vmem:[%s2 + $0xc8] sm:$0xff] %v1458
  %1721 = vst [vmem:[%s2 + $0xd0] sm:$0xff] %v1460
  %1722 = vst [vmem:[%s2 + $0xd8] sm:$0xff] %v1462
  %1723 = vst [vmem:[%s2 + $0xe0] sm:$0xff] %v1464
  %1724 = vst [vmem:[%s2 + $0xe8] sm:$0xff] %v1466
  %1725 = vst [vmem:[%s2 + $0xf0] sm:$0xff] %v1468
  %1726 = vst [vmem:[%s2 + $0xf8] sm:$0xff] %v1470
  %1727 = vst [vmem:[%s2 + $0x100] sm:$0xff] %v1472
  %1728 = vst [vmem:[%s2 + $0x108] sm:$0xff] %v1474
  %1729 = vst [vmem:[%s2 + $0x110] sm:$0xff] %v1476
  %1730 = vst [vmem:[%s2 + $0x118] sm:$0xff] %v1478
  %1731 = vst [vmem:[%s2 + $0x120] sm:$0xff] %v1480
  %1732 = vst [vmem:[%s2 + $0x128] sm:$0xff] %v1482
  %1733 = vst [vmem:[%s2 + $0x130] sm:$0xff] %v1484
  %1734 = vst [vmem:[%s2 + $0x138] sm:$0xff] %v1486
  %1735 = vst [vmem:[%s2 + $0x140] sm:$0xff] %v1488
  %1736 = vst [vmem:[%s2 + $0x148] sm:$0xff] %v1490
  %1737 = vst [vmem:[%s2 + $0x150] sm:$0xff] %v1492
  %1738 = vst [vmem:[%s2 + $0x158] sm:$0xff] %v1494
  %1739 = vst [vmem:[%s2 + $0x160] sm:$0xff] %v1496
  %1740 = vst [vmem:[%s2 + $0x168] sm:$0xff] %v1498
  %1741 = vst [vmem:[%s2 + $0x170] sm:$0xff] %v1500
  %1742 = vst [vmem:[%s2 + $0x178] sm:$0xff] %v1502
  %1743 = vst [vmem:[%s2 + $0x180] sm:$0xff] %v1504
  %1744 = vst [vmem:[%s2 + $0x188] sm:$0xff] %v1506
  %1745 = vst [vmem:[%s2 + $0x190] sm:$0xff] %v1508
  %1746 = vst [vmem:[%s2 + $0x198] sm:$0xff] %v1510
  %1747 = vst [vmem:[%s2 + $0x1a0] sm:$0xff] %v1512
  %1748 = vst [vmem:[%s2 + $0x1a8] sm:$0xff] %v1514
  %1749 = vst [vmem:[%s2 + $0x1b0] sm:$0xff] %v1516
  %1750 = vst [vmem:[%s2 + $0x1b8] sm:$0xff] %v1518
  %1751 = vst [vmem:[%s2 + $0x1c0] sm:$0xff] %v1520
  %1752 = vst [vmem:[%s2 + $0x1c8] sm:$0xff] %v1522
  %1753 = vst [vmem:[%s2 + $0x1d0] sm:$0xff] %v1524
  %1754 = vst [vmem:[%s2 + $0x1d8] sm:$0xff] %v1526
  %1755 = vst [vmem:[%s2 + $0x1e0] sm:$0xff] %v1528
  %1756 = vst [vmem:[%s2 + $0x1e8] sm:$0xff] %v1530
  %1757 = vst [vmem:[%s2 + $0x1f0] sm:$0xff] %v1532
  %1758 = vst [vmem:[%s2 + $0x1f8] sm:$0xff] %v1534
  %1759 = vst [vmem:[%s2 + $0x200] sm:$0xff] %v1536
  %1760 = vst [vmem:[%s2 + $0x208] sm:$0xff] %v1538
  %1761 = vst [vmem:[%s2 + $0x210] sm:$0xff] %v1540
  %1762 = vst [vmem:[%s2 + $0x218] sm:$0xff] %v1542
  %1763 = vst [vmem:[%s2 + $0x220] sm:$0xff] %v1544
  %1764 = vst [vmem:[%s2 + $0x228] sm:$0xff] %v1546
  %1765 = vst [vmem:[%s2 + $0x230] sm:$0xff] %v1548
  %1766 = vst [vmem:[%s2 + $0x238] sm:$0xff] %v1550
  %1767 = vst [vmem:[%s2 + $0x240] sm:$0xff] %v1552
  %1768 = vst [vmem:[%s2 + $0x248] sm:$0xff] %v1554
  %1769 = vst [vmem:[%s2 + $0x250] sm:$0xff] %v1556
  %1770 = vst [vmem:[%s2 + $0x258] sm:$0xff] %v1558
  %1771 = vst [vmem:[%s2 + $0x260] sm:$0xff] %v1560
  %1772 = vst [vmem:[%s2 + $0x268] sm:$0xff] %v1562
  %1773 = vst [vmem:[%s2 + $0x270] sm:$0xff] %v1564
  %1774 = vst [vmem:[%s2 + $0x278] sm:$0xff] %v1566
  %1775 = vst [vmem:[%s2 + $0x280] sm:$0xff] %v1568
  %1776 = vst [vmem:[%s2 + $0x288] sm:$0xff] %v1570
  %1777 = vst [vmem:[%s2 + $0x290] sm:$0xff] %v1572
  %1778 = vst [vmem:[%s2 + $0x298] sm:$0xff] %v1574
  %1779 = vst [vmem:[%s2 + $0x2a0] sm:$0xff] %v1576
  %1780 = vst [vmem:[%s2 + $0x2a8] sm:$0xff] %v1578
  %1781 = vst [vmem:[%s2 + $0x2b0] sm:$0xff] %v1580
  %1782 = vst [vmem:[%s2 + $0x2b8] sm:$0xff] %v1582
  %1783 = vst [vmem:[%s2 + $0x2c0] sm:$0xff] %v1584
  %1784 = vst [vmem:[%s2 + $0x2c8] sm:$0xff] %v1586
  %1785 = vst [vmem:[%s2 + $0x2d0] sm:$0xff] %v1588
  %1786 = vst [vmem:[%s2 + $0x2d8] sm:$0xff] %v1590
  %1787 = vst [vmem:[%s2 + $0x2e0] sm:$0xff] %v1592
  %1788 = vst [vmem:[%s2 + $0x2e8] sm:$0xff] %v1594
  %1789 = vst [vmem:[%s2 + $0x2f0] sm:$0xff] %v1596
  %1790 = vst [vmem:[%s2 + $0x2f8] sm:$0xff] %v1598
  %1791 = vst [vmem:[%s2 + $0x300] sm:$0xff] %v1600
  %1792 = vst [vmem:[%s2 + $0x308] sm:$0xff] %v1602
  %1793 = vst [vmem:[%s2 + $0x310] sm:$0xff] %v1604
  %1794 = vst [vmem:[%s2 + $0x318] sm:$0xff] %v1606
  %1795 = vst [vmem:[%s2 + $0x320] sm:$0xff] %v1608
  %1796 = vst [vmem:[%s2 + $0x328] sm:$0xff] %v1610
  %1797 = vst [vmem:[%s2 + $0x330] sm:$0xff] %v1612
  %1798 = vst [vmem:[%s2 + $0x338] sm:$0xff] %v1614
  %1799 = vst [vmem:[%s2 + $0x340] sm:$0xff] %v1616
  %1800 = vst [vmem:[%s2 + $0x348] sm:$0xff] %v1618
  %1801 = vst [vmem:[%s2 + $0x350] sm:$0xff] %v1620
  %1802 = vst [vmem:[%s2 + $0x358] sm:$0xff] %v1622
  %1803 = vst [vmem:[%s2 + $0x360] sm:$0xff] %v1624
  %1804 = vst [vmem:[%s2 + $0x368] sm:$0xff] %v1626
  %1805 = vst [vmem:[%s2 + $0x370] sm:$0xff] %v1628
  %1806 = vst [vmem:[%s2 + $0x378] sm:$0xff] %v1630
  %1807 = vst [vmem:[%s2 + $0x380] sm:$0xff] %v1632
  %1808 = vst [vmem:[%s2 + $0x388] sm:$0xff] %v1634
  %1809 = vst [vmem:[%s2 + $0x390] sm:$0xff] %v1636
  %1810 = vst [vmem:[%s2 + $0x398] sm:$0xff] %v1638
  %1811 = vst [vmem:[%s2 + $0x3a0] sm:$0xff] %v1640
  %1812 = vst [vmem:[%s2 + $0x3a8] sm:$0xff] %v1642
  %1813 = vst [vmem:[%s2 + $0x3b0] sm:$0xff] %v1644
  %1814 = vst [vmem:[%s2 + $0x3b8] sm:$0xff] %v1646
  %1815 = vst [vmem:[%s2 + $0x3c0] sm:$0xff] %v1648
  %1816 = vst [vmem:[%s2 + $0x3c8] sm:$0xff] %v1650
  %1817 = vst [vmem:[%s2 + $0x3d0] sm:$0xff] %v1652
  %1818 = vst [vmem:[%s2 + $0x3d8] sm:$0xff] %v1654
  %1819 = vst [vmem:[%s2 + $0x3e0] sm:$0xff] %v1656
  %1820 = vst [vmem:[%s2 + $0x3e8] sm:$0xff] %v1658
  %1821 = vst [vmem:[%s2 + $0x3f0] sm:$0xff] %v1660
  %1822 = vst [vmem:[%s2 + $0x3f8] sm:$0xff] %v1662
  %1823 = vst [vmem:[%s2 + $0x400] sm:$0xff] %v1664
  %1824 = vst [vmem:[%s2 + $0x408] sm:$0xff] %v1666
  %1825 = vst [vmem:[%s2 + $0x410] sm:$0xff] %v1668
  %1826 = vst [vmem:[%s2 + $0x418] sm:$0xff] %v1670
  %1827 = vst [vmem:[%s2 + $0x420] sm:$0xff] %v1672
  %1828 = vst [vmem:[%s2 + $0x428] sm:$0xff] %v1674
  %1829 = vst [vmem:[%s2 + $0x430] sm:$0xff] %v1676
  %1830 = vst [vmem:[%s2 + $0x438] sm:$0xff] %v1678
  %1831 = vst [vmem:[%s2 + $0x440] sm:$0xff] %v1680
  %1832 = vst [vmem:[%s2 + $0x448] sm:$0xff] %v1682
  %1833 = vst [vmem:[%s2 + $0x450] sm:$0xff] %v1684
  %1834 = vst [vmem:[%s2 + $0x458] sm:$0xff] %v1686
  %1835 = vst [vmem:[%s2 + $0x460] sm:$0xff] %v1688
  %1836 = vst [vmem:[%s2 + $0x468] sm:$0xff] %v1690
  %1837 = vst [vmem:[%s2 + $0x470] sm:$0xff] %v1692
  %1838 = vst [vmem:[%s2 + $0x478] sm:$0xff] %v1694
  // Predicated region
  $region10: #{inner_product_decoder_matmul.1} parent=0 // pred_check
    _
  $region11: #{inner_product_decoder_matmul.1} parent=0 // pred_check_branch
    %1840 = sbr.rel (0) target = $region13
  $region12: #{inner_product_decoder_matmul.1} parent=0 // pred_region
    _
  $region13: #{inner_product_decoder_matmul.1} parent=0 // pred_fallthru
    _
  // Predicated region
  $region14: #{inner_product_decoder_matmul.1} parent=0 // pred_check
    _
  $region15: #{inner_product_decoder_matmul.1} parent=0 // pred_check_branch
    %1842 = sbr.rel (0) target = $region17
  $region16: #{inner_product_decoder_matmul.1} parent=0 // pred_region
    _
  $region17: #{inner_product_decoder_matmul.1} parent=0 // pred_fallthru
    _

</llo_original>
